<compile_context>
chip_gen: v6e
topology: v6e:2x2x1
jax: 0.10.0
libtpu: 0.0.40
codegen_flags: <defaults>
</compile_context>

<pallas_src>
import functools

import jax
import jax.numpy as jnp
from jax import lax
from jax.experimental import pallas as pl
from jax.experimental.pallas import tpu as pltpu

IN_EPS = 1e-5        # nn.InstanceNorm2d default eps
NEG_SLOPE = 0.2      # nn.LeakyReLU(0.2)

# NOTE: per-generation tuning -- raise toward ~96 MiB on v6e (128 MiB VMEM),
# keep <= ~48 MiB on v7x (64 MiB VMEM). 32 MiB is safe on all generations and
# far above this kernel's actual working set.
_COMPILER_PARAMS_VMEM = 32 << 20


def _leaky_relu(x):
    return jnp.where(x >= 0, x, NEG_SLOPE * x)


# ------------------------ pass 1: instance-norm stats ----------------------- #
def _stats_kernel(x_ref, w_ref, stat_ref, *, hw):
    """Accumulate per-(n, c) sum / sumsq of y1 = x @ W1 over row tiles."""
    t = pl.program_id(1)
    nt = pl.num_programs(1)

    @pl.when(t == 0)
    def _():
        stat_ref[...] = jnp.zeros_like(stat_ref)

    # (tile_m, Cin) @ (Cin, C) on the MXU, f32 accumulation.
    y = jnp.dot(x_ref[0], w_ref[...], preferred_element_type=jnp.float32)
    s = jnp.sum(y, axis=0, keepdims=True)          # (1, C)
    ss = jnp.sum(y * y, axis=0, keepdims=True)     # (1, C)
    stat_ref[...] += jnp.concatenate([s, ss], axis=0)[None]   # (1, 2, C)

    @pl.when(t == nt - 1)
    def _():
        acc = stat_ref[...]                         # (1, 2, C)
        inv = 1.0 / hw
        mean = acc[:, 0:1, :] * inv                 # biased statistics
        var = acc[:, 1:2, :] * inv - mean * mean
        rstd = lax.rsqrt(var + IN_EPS)
        stat_ref[...] = jnp.concatenate([mean, rstd], axis=1)


def instance_stats(x3d, w1, tile_m):
    """x3d: (N, HW, Cin), w1: (Cin, C) -> (N, 2, C) with rows [mean, rstd]."""
    N, HW, Cin = x3d.shape
    C = w1.shape[1]
    T = HW // tile_m
    kernel = functools.partial(_stats_kernel, hw=float(HW))
    return pl.pallas_call(
        kernel,
        out_shape=jax.ShapeDtypeStruct((N, 2, C), jnp.float32),
        grid_spec=pltpu.PrefetchScalarGridSpec(
            num_scalar_prefetch=0,
            grid=(N, T),
            in_specs=[
                pl.BlockSpec((1, tile_m, Cin), lambda n, t: (n, t, 0)),
                pl.BlockSpec((Cin, C), lambda n, t: (0, 0)),  # weight resident
            ],
            out_specs=pl.BlockSpec((1, 2, C), lambda n, t: (n, 0, 0)),
        ),
        compiler_params=pltpu.CompilerParams(
            dimension_semantics=("parallel", "arbitrary"),
            vmem_limit_bytes=_COMPILER_PARAMS_VMEM),
        cost_estimate=pl.CostEstimate(
            flops=2 * N * HW * Cin * C,
            transcendentals=N * C,
            bytes_accessed=4 * (N * HW * Cin + Cin * C + N * 2 * C)),
    )(x3d, w1)


# ------------- pass 2: both 1x1 convs + norm + LeakyReLU + concat ------------ #
def _fused_kernel(x_ref, skip_ref, w1_ref, w2_ref, stat_ref, out_ref):
    st = stat_ref[...]                  # (1, 2, C)
    mean = st[0, 0:1, :]                # (1, C)
    rstd = st[0, 1:2, :]                # (1, C)

    # x branch: 1x1 conv (recomputed, cheap) + instance norm + LeakyReLU.
    y1 = jnp.dot(x_ref[0], w1_ref[...], preferred_element_type=jnp.float32)
    a = _leaky_relu((y1 - mean) * rstd)

    # skip branch: 1x1 conv + LeakyReLU.
    y2 = jnp.dot(skip_ref[0], w2_ref[...], preferred_element_type=jnp.float32)
    b = _leaky_relu(y2)

    # Channel concat written as one lane-dense (tile_m, 2C) store.
    out_ref[...] = jnp.concatenate([a, b], axis=-1)[None].astype(out_ref.dtype)


def unetcat_fused(x3d, skip3d, w1, w2, stats, tile_m):
    N, HW, Cin = x3d.shape
    C = w1.shape[1]
    T = HW // tile_m
    return pl.pallas_call(
        _fused_kernel,
        out_shape=jax.ShapeDtypeStruct((N, HW, 2 * C), jnp.float32),
        grid_spec=pltpu.PrefetchScalarGridSpec(
            num_scalar_prefetch=0,
            grid=(N, T),
            in_specs=[
                pl.BlockSpec((1, tile_m, Cin), lambda n, t: (n, t, 0)),
                pl.BlockSpec((1, tile_m, C), lambda n, t: (n, t, 0)),
                pl.BlockSpec((Cin, C), lambda n, t: (0, 0)),   # W1 resident
                pl.BlockSpec((C, C), lambda n, t: (0, 0)),     # W2 resident
                pl.BlockSpec((1, 2, C), lambda n, t: (n, 0, 0)),
            ],
            out_specs=pl.BlockSpec((1, tile_m, 2 * C), lambda n, t: (n, t, 0)),
        ),
        compiler_params=pltpu.CompilerParams(
            dimension_semantics=("parallel", "parallel"),
            vmem_limit_bytes=_COMPILER_PARAMS_VMEM),
        cost_estimate=pl.CostEstimate(
            flops=2 * N * HW * (Cin + C) * C,
            transcendentals=0,
            bytes_accessed=4 * (N * HW * (Cin + 3 * C)
                                + (Cin + C) * C + N * 2 * C)),
    )(x3d, skip3d, w1, w2, stats)


# --------------------------------- wrapper ---------------------------------- #
def unetcat_forward(x, skip, w1, w2, *, tile_m=None):
    """UNetcat.forward.  x: (N,H,W,in_size), skip: (N,H,W,out_size) NHWC.

    w1: (in_size, out_size)  = torch conv weight[:, :, 0, 0].T  (model conv)
    w2: (out_size, out_size) = torch conv weight[:, :, 0, 0].T  (conv1)
    Returns (N, H, W, 2*out_size) = concat([x branch, skip branch], channels).
    """
    N, H, W, Cin = x.shape
    C = w1.shape[1]
    HW = H * W
    if tile_m is None:
        tile_m = HW
        for cand in (1024, 512, 256, 128):
            if HW % cand == 0:
                tile_m = cand
                break
    assert HW % tile_m == 0, (HW, tile_m)

    x3 = x.reshape(N, HW, Cin)
    s3 = skip.reshape(N, HW, C)
    stats = instance_stats(x3, w1, tile_m)                 # (N, 2, C)
    out = unetcat_fused(x3, s3, w1, w2, stats, tile_m)     # (N, HW, 2C)
    return out.reshape(N, H, W, 2 * C)


# ------------------------------ pure-JAX reference --------------------------- #
def unetcat_reference(x, skip, w1, w2):
    hi = jax.lax.Precision.HIGHEST
    y1 = jnp.einsum("nhwc,cd->nhwd", x, w1, precision=hi)
    mean = jnp.mean(y1, axis=(1, 2), keepdims=True)
    var = jnp.mean(jnp.square(y1 - mean), axis=(1, 2), keepdims=True)
    y1 = (y1 - mean) * jax.lax.rsqrt(var + IN_EPS)
    y1 = jnp.where(y1 >= 0, y1, NEG_SLOPE * y1)
    y2 = jnp.einsum("nhwc,cd->nhwd", skip, w2, precision=hi)
    y2 = jnp.where(y2 >= 0, y2, NEG_SLOPE * y2)
    return jnp.concatenate([y1, y2], axis=-1)


# ----------------------------------- main ------------------------------------ #
if __name__ == "__main__":
    key = jax.random.PRNGKey(0)
    k1, k2, k3, k4 = jax.random.split(key, 4)

    N, H, W = 2, 16, 16
    in_size, out_size = 64, 64   # output = 2*out_size = 128 channels (lane-dense)

    x = jax.random.normal(k1, (N, H, W, in_size), jnp.float32)
    skip = jax.random.normal(k2, (N, H, W, out_size), jnp.float32)
    w1 = 0.1 * jax.random.normal(k3, (in_size, out_size), jnp.float32)
    w2 = 0.1 * jax.random.normal(k4, (out_size, out_size), jnp.float32)

    fwd = jax.jit(unetcat_forward, static_argnames=("tile_m",))
    # tile_m=128 -> 2 row tiles per sample, exercising the stats accumulation.
    out = fwd(x, skip, w1, w2, tile_m=128)
    out = jax.block_until_ready(out)

    assert out.shape == (N, H, W, 2 * out_size), out.shape
    assert bool(jnp.all(jnp.isfinite(out)))

    ref = unetcat_reference(x, skip, w1, w2)
    max_err = float(jnp.max(jnp.abs(out - ref)))
    assert max_err < 1e-2, f"max abs error {max_err}"

    print("KERNEL_OK")
</pallas_src>

<mosaic_0001>
module attributes {stable_mosaic.version = 11 : i64} {
  func.func @_stats_kernel(%arg0: i32, %arg1: i32, %arg2: memref<1x128x64xf32, #tpu.memory_space<vmem>>, %arg3: memref<64x64xf32, #tpu.memory_space<vmem>>, %arg4: memref<1x2x64xf32, #tpu.memory_space<vmem>>) attributes {dimension_semantics = [#tpu.dimension_semantics<parallel>, #tpu.dimension_semantics<arbitrary>], iteration_bounds = array<i64: 2, 2>, scalar_prefetch = 0 : i64, scratch_operands = 0 : i64, tpu.core_type = #tpu.core_type<tc>, window_params = [{transform_indices = @transform_0, window_bounds = array<i64: 1, 128, 64>}, {pipeline_mode = #tpu.pipeline_mode<synchronous>, transform_indices = @transform_1, window_bounds = array<i64: 64, 64>}, {transform_indices = @transform_2, window_bounds = array<i64: 1, 2, 64>}]} {
    %c0_i32 = arith.constant 0 : i32
    %0 = arith.cmpi eq, %arg1, %c0_i32 : i32
    %1 = arith.extui %0 : i1 to i32
    %c0_i32_0 = arith.constant 0 : i32
    %2 = arith.cmpi ne, %1, %c0_i32_0 : i32
    scf.if %2 {
      %cst_14 = arith.constant 0.000000e+00 : f32
      %20 = vector.broadcast %cst_14 : f32 to vector<1x2x64xf32>
      %c0_15 = arith.constant 0 : index
      %c0_16 = arith.constant 0 : index
      %c0_17 = arith.constant 0 : index
      %21 = vector.load %arg4[%c0_15, %c0_16, %c0_17] : memref<1x2x64xf32, #tpu.memory_space<vmem>>, vector<1x2x64xf32>
      tpu.vector_store %arg4[%c0_15, %c0_16, %c0_17], %20 {strides = array<i32>} : memref<1x2x64xf32, #tpu.memory_space<vmem>>, vector<1x2x64xf32>,
    } else {
    }
    %c0 = arith.constant 0 : index
    %c0_1 = arith.constant 0 : index
    %c0_2 = arith.constant 0 : index
    %3 = vector.load %arg2[%c0, %c0_1, %c0_2] : memref<1x128x64xf32, #tpu.memory_space<vmem>>, vector<1x128x64xf32>
    %4 = vector.shape_cast %3 : vector<1x128x64xf32> to vector<128x64xf32>
    %c0_3 = arith.constant 0 : index
    %c0_4 = arith.constant 0 : index
    %5 = vector.load %arg3[%c0_3, %c0_4] : memref<64x64xf32, #tpu.memory_space<vmem>>, vector<64x64xf32>
    %cst = arith.constant dense<0.000000e+00> : vector<128x64xf32>
    %6 = tpu.matmul %4, %5, %cst {dimension_numbers = #tpu.dot_dimension_numbers<[1], [0], [0], [1], [0, 0, 1, 1], [], []>} : vector<128x64xf32>, vector<64x64xf32>, vector<128x64xf32> -> vector<128x64xf32>
    %cst_5 = arith.constant dense<0.000000e+00> : vector<64xf32>
    %7 = vector.multi_reduction <add>, %6, %cst_5 [0] : vector<128x64xf32> to vector<64xf32>
    %8 = vector.shape_cast %7 : vector<64xf32> to vector<1x64xf32>
    %9 = arith.mulf %6, %6 : vector<128x64xf32>
    %cst_6 = arith.constant dense<0.000000e+00> : vector<64xf32>
    %10 = vector.multi_reduction <add>, %9, %cst_6 [0] : vector<128x64xf32> to vector<64xf32>
    %11 = vector.shape_cast %10 : vector<64xf32> to vector<1x64xf32>
    %c0_7 = arith.constant 0 : index
    %c0_8 = arith.constant 0 : index
    %c0_9 = arith.constant 0 : index
    %12 = vector.load %arg4[%c0_7, %c0_8, %c0_9] : memref<1x2x64xf32, #tpu.memory_space<vmem>>, vector<1x2x64xf32>
    %13 = tpu.concatenate %8, %11 in 0 : vector<1x64xf32>, vector<1x64xf32> -> vector<2x64xf32>
    %14 = vector.shape_cast %13 : vector<2x64xf32> to vector<1x2x64xf32>
    %15 = arith.addf %12, %14 : vector<1x2x64xf32>
    %c0_10 = arith.constant 0 : index
    %c0_11 = arith.constant 0 : index
    %c0_12 = arith.constant 0 : index
    %16 = vector.load %arg4[%c0_10, %c0_11, %c0_12] : memref<1x2x64xf32, #tpu.memory_space<vmem>>, vector<1x2x64xf32>
    tpu.vector_store %arg4[%c0_10, %c0_11, %c0_12], %15 {strides = array<i32>} : memref<1x2x64xf32, #tpu.memory_space<vmem>>, vector<1x2x64xf32>,
    %c1_i32 = arith.constant 1 : i32
    %17 = arith.cmpi eq, %arg1, %c1_i32 : i32
    %18 = arith.extui %17 : i1 to i32
    %c0_i32_13 = arith.constant 0 : i32
    %19 = arith.cmpi ne, %18, %c0_i32_13 : i32
    scf.if %19 {
      %c0_14 = arith.constant 0 : index
      %c0_15 = arith.constant 0 : index
      %c0_16 = arith.constant 0 : index
      %20 = vector.load %arg4[%c0_14, %c0_15, %c0_16] : memref<1x2x64xf32, #tpu.memory_space<vmem>>, vector<1x2x64xf32>
      %21 = vector.extract_strided_slice %20 {offsets = [0, 0, 0], sizes = [1, 1, 64], strides = [1, 1, 1]} : vector<1x2x64xf32> to vector<1x1x64xf32>
      %cst_17 = arith.constant 3.906250e-03 : f32
      %22 = vector.broadcast %cst_17 : f32 to vector<1x1x64xf32>
      %23 = arith.mulf %21, %22 : vector<1x1x64xf32>
      %24 = vector.extract_strided_slice %20 {offsets = [0, 1, 0], sizes = [1, 1, 64], strides = [1, 1, 1]} : vector<1x2x64xf32> to vector<1x1x64xf32>
      %cst_18 = arith.constant 3.906250e-03 : f32
      %25 = vector.broadcast %cst_18 : f32 to vector<1x1x64xf32>
      %26 = arith.mulf %24, %25 : vector<1x1x64xf32>
      %27 = arith.mulf %23, %23 : vector<1x1x64xf32>
      %28 = arith.subf %26, %27 : vector<1x1x64xf32>
      %cst_19 = arith.constant 9.99999974E-6 : f32
      %29 = vector.broadcast %cst_19 : f32 to vector<1x1x64xf32>
      %30 = arith.addf %28, %29 : vector<1x1x64xf32>
      %31 = math.rsqrt %30 : vector<1x1x64xf32>
      %32 = tpu.concatenate %23, %31 in 1 : vector<1x1x64xf32>, vector<1x1x64xf32> -> vector<1x2x64xf32>
      %c0_20 = arith.constant 0 : index
      %c0_21 = arith.constant 0 : index
      %c0_22 = arith.constant 0 : index
      %33 = vector.load %arg4[%c0_20, %c0_21, %c0_22] : memref<1x2x64xf32, #tpu.memory_space<vmem>>, vector<1x2x64xf32>
      tpu.vector_store %arg4[%c0_20, %c0_21, %c0_22], %32 {strides = array<i32>} : memref<1x2x64xf32, #tpu.memory_space<vmem>>, vector<1x2x64xf32>,
    } else {
    }
    return
  }
  func.func @transform_0(%arg0: i32, %arg1: i32) -> (i32, i32, i32) {
    %c0_i32 = arith.constant 0 : i32
    %c0_i32_0 = arith.constant 0 : i32
    return %arg0, %arg1, %c0_i32 : i32, i32, i32
  }
  func.func @transform_1(%arg0: i32, %arg1: i32) -> (i32, i32) {
    %c0_i32 = arith.constant 0 : i32
    %c0_i32_0 = arith.constant 0 : i32
    %c0_i32_1 = arith.constant 0 : i32
    return %c0_i32, %c0_i32_0 : i32, i32
  }
  func.func @transform_2(%arg0: i32, %arg1: i32) -> (i32, i32, i32) {
    %c0_i32 = arith.constant 0 : i32
    %c0_i32_0 = arith.constant 0 : i32
    %c0_i32_1 = arith.constant 0 : i32
    return %arg0, %c0_i32, %c0_i32_0 : i32, i32, i32
  }
}

module attributes {stable_mosaic.version = 11 : i64} {
  func.func @_fused_kernel(%arg0: i32, %arg1: i32, %arg2: memref<1x128x64xf32, #tpu.memory_space<vmem>>, %arg3: memref<1x128x64xf32, #tpu.memory_space<vmem>>, %arg4: memref<64x64xf32, #tpu.memory_space<vmem>>, %arg5: memref<64x64xf32, #tpu.memory_space<vmem>>, %arg6: memref<1x2x64xf32, #tpu.memory_space<vmem>>, %arg7: memref<1x128x128xf32, #tpu.memory_space<vmem>>) attributes {dimension_semantics = [#tpu.dimension_semantics<parallel>, #tpu.dimension_semantics<parallel>], iteration_bounds = array<i64: 2, 2>, scalar_prefetch = 0 : i64, scratch_operands = 0 : i64, tpu.core_type = #tpu.core_type<tc>, window_params = [{transform_indices = @transform_0, window_bounds = array<i64: 1, 128, 64>}, {transform_indices = @transform_1, window_bounds = array<i64: 1, 128, 64>}, {pipeline_mode = #tpu.pipeline_mode<synchronous>, transform_indices = @transform_2, window_bounds = array<i64: 64, 64>}, {pipeline_mode = #tpu.pipeline_mode<synchronous>, transform_indices = @transform_3, window_bounds = array<i64: 64, 64>}, {transform_indices = @transform_4, window_bounds = array<i64: 1, 2, 64>}, {transform_indices = @transform_5, window_bounds = array<i64: 1, 128, 128>}]} {
    %c0 = arith.constant 0 : index
    %c0_0 = arith.constant 0 : index
    %c0_1 = arith.constant 0 : index
    %0 = vector.load %arg6[%c0, %c0_0, %c0_1] : memref<1x2x64xf32, #tpu.memory_space<vmem>>, vector<1x2x64xf32>
    %1 = vector.extract_strided_slice %0 {offsets = [0, 0, 0], sizes = [1, 1, 64], strides = [1, 1, 1]} : vector<1x2x64xf32> to vector<1x1x64xf32>
    %2 = vector.shape_cast %1 : vector<1x1x64xf32> to vector<1x64xf32>
    %3 = vector.extract_strided_slice %0 {offsets = [0, 1, 0], sizes = [1, 1, 64], strides = [1, 1, 1]} : vector<1x2x64xf32> to vector<1x1x64xf32>
    %4 = vector.shape_cast %3 : vector<1x1x64xf32> to vector<1x64xf32>
    %c0_2 = arith.constant 0 : index
    %c0_3 = arith.constant 0 : index
    %c0_4 = arith.constant 0 : index
    %5 = vector.load %arg2[%c0_2, %c0_3, %c0_4] : memref<1x128x64xf32, #tpu.memory_space<vmem>>, vector<1x128x64xf32>
    %6 = vector.shape_cast %5 : vector<1x128x64xf32> to vector<128x64xf32>
    %c0_5 = arith.constant 0 : index
    %c0_6 = arith.constant 0 : index
    %7 = vector.load %arg4[%c0_5, %c0_6] : memref<64x64xf32, #tpu.memory_space<vmem>>, vector<64x64xf32>
    %cst = arith.constant dense<0.000000e+00> : vector<128x64xf32>
    %8 = tpu.matmul %6, %7, %cst {dimension_numbers = #tpu.dot_dimension_numbers<[1], [0], [0], [1], [0, 0, 1, 1], [], []>} : vector<128x64xf32>, vector<64x64xf32>, vector<128x64xf32> -> vector<128x64xf32>
    %9 = vector.broadcast %2 : vector<1x64xf32> to vector<128x64xf32>
    %10 = arith.subf %8, %9 : vector<128x64xf32>
    %11 = vector.broadcast %4 : vector<1x64xf32> to vector<128x64xf32>
    %12 = arith.mulf %10, %11 : vector<128x64xf32>
    %cst_7 = arith.constant 0.000000e+00 : f32
    %13 = vector.broadcast %cst_7 : f32 to vector<128x64xf32>
    %14 = arith.cmpf oge, %12, %13 : vector<128x64xf32>
    %cst_8 = arith.constant 2.000000e-01 : f32
    %15 = vector.broadcast %cst_8 : f32 to vector<128x64xf32>
    %16 = arith.mulf %15, %12 : vector<128x64xf32>
    %17 = arith.select %14, %12, %16 : vector<128x64xi1>, vector<128x64xf32>
    %c0_9 = arith.constant 0 : index
    %c0_10 = arith.constant 0 : index
    %c0_11 = arith.constant 0 : index
    %18 = vector.load %arg3[%c0_9, %c0_10, %c0_11] : memref<1x128x64xf32, #tpu.memory_space<vmem>>, vector<1x128x64xf32>
    %19 = vector.shape_cast %18 : vector<1x128x64xf32> to vector<128x64xf32>
    %c0_12 = arith.constant 0 : index
    %c0_13 = arith.constant 0 : index
    %20 = vector.load %arg5[%c0_12, %c0_13] : memref<64x64xf32, #tpu.memory_space<vmem>>, vector<64x64xf32>
    %cst_14 = arith.constant dense<0.000000e+00> : vector<128x64xf32>
    %21 = tpu.matmul %19, %20, %cst_14 {dimension_numbers = #tpu.dot_dimension_numbers<[1], [0], [0], [1], [0, 0, 1, 1], [], []>} : vector<128x64xf32>, vector<64x64xf32>, vector<128x64xf32> -> vector<128x64xf32>
    %cst_15 = arith.constant 0.000000e+00 : f32
    %22 = vector.broadcast %cst_15 : f32 to vector<128x64xf32>
    %23 = arith.cmpf oge, %21, %22 : vector<128x64xf32>
    %cst_16 = arith.constant 2.000000e-01 : f32
    %24 = vector.broadcast %cst_16 : f32 to vector<128x64xf32>
    %25 = arith.mulf %24, %21 : vector<128x64xf32>
    %26 = arith.select %23, %21, %25 : vector<128x64xi1>, vector<128x64xf32>
    %27 = tpu.concatenate %17, %26 in 1 : vector<128x64xf32>, vector<128x64xf32> -> vector<128x128xf32>
    %28 = vector.shape_cast %27 : vector<128x128xf32> to vector<1x128x128xf32>
    %c0_17 = arith.constant 0 : index
    %c0_18 = arith.constant 0 : index
    %c0_19 = arith.constant 0 : index
    %29 = vector.load %arg7[%c0_17, %c0_18, %c0_19] : memref<1x128x128xf32, #tpu.memory_space<vmem>>, vector<1x128x128xf32>
    tpu.vector_store %arg7[%c0_17, %c0_18, %c0_19], %28 {strides = array<i32>} : memref<1x128x128xf32, #tpu.memory_space<vmem>>, vector<1x128x128xf32>,
    return
  }
  func.func @transform_0(%arg0: i32, %arg1: i32) -> (i32, i32, i32) {
    %c0_i32 = arith.constant 0 : i32
    %c0_i32_0 = arith.constant 0 : i32
    return %arg0, %arg1, %c0_i32 : i32, i32, i32
  }
  func.func @transform_1(%arg0: i32, %arg1: i32) -> (i32, i32, i32) {
    %c0_i32 = arith.constant 0 : i32
    %c0_i32_0 = arith.constant 0 : i32
    return %arg0, %arg1, %c0_i32 : i32, i32, i32
  }
  func.func @transform_2(%arg0: i32, %arg1: i32) -> (i32, i32) {
    %c0_i32 = arith.constant 0 : i32
    %c0_i32_0 = arith.constant 0 : i32
    %c0_i32_1 = arith.constant 0 : i32
    return %c0_i32, %c0_i32_0 : i32, i32
  }
  func.func @transform_3(%arg0: i32, %arg1: i32) -> (i32, i32) {
    %c0_i32 = arith.constant 0 : i32
    %c0_i32_0 = arith.constant 0 : i32
    %c0_i32_1 = arith.constant 0 : i32
    return %c0_i32, %c0_i32_0 : i32, i32
  }
  func.func @transform_4(%arg0: i32, %arg1: i32) -> (i32, i32, i32) {
    %c0_i32 = arith.constant 0 : i32
    %c0_i32_0 = arith.constant 0 : i32
    %c0_i32_1 = arith.constant 0 : i32
    return %arg0, %c0_i32, %c0_i32_0 : i32, i32, i32
  }
  func.func @transform_5(%arg0: i32, %arg1: i32) -> (i32, i32, i32) {
    %c0_i32 = arith.constant 0 : i32
    %c0_i32_0 = arith.constant 0 : i32
    return %arg0, %arg1, %c0_i32 : i32, i32, i32
  }
}

</mosaic_0001>

<llo_original>
// kernel: unetcat_forward.2
$region0: #{unetcat_forward.2}
  #allocation0 [shape = 'u32[]', space=smem, size = 0x4, offset = 0x4, fixed_abs, tag = 'smem constant byte address 0x4 - core index']
  #allocation1 [shape = 'u32[144,128]{1,0:T(1,128)}', space=vmem, size = 0x12000, scoped, tag = 'internal scratch']
  %s0 = inlined_call_operand.hbm [shape: f32[2,256,64], index: 0, kind: input, shape index: {}]
  %s1 = inlined_call_operand.hbm [shape: f32[64,64], index: 1, kind: input, shape index: {}]
  %s2 = inlined_call_operand.vmem [shape: f32[2,2,64], index: 2, kind: output, shape index: {}]
  %s3 = sld [smem:[#allocation0]]
  $region57: #{unetcat_forward.2} parent=0
    _
  %s5 = ssub.s32 1, %s3
  %s6 = scalar_select 0, %s5, %s3
  $region1: #{unetcat_forward.2} parent=0
    #allocation2 [shape = 'u8[131072]{0}', space=vmem, size = 0x20000, scoped, tag = 'input window, operand 0']
    #allocation3 [shape = 's32[2]{0}', space=sflag, size = 0x8, scoped, tag = 'scoped memory for unetcat_forward.2']
    #allocation4 [shape = 'u8[32768]{0}', space=vmem, size = 0x8000, scoped, tag = 'input window, operand 1, single buffered']
    #allocation5 [shape = 's32[1]{0}', space=sflag, size = 0x4, scoped, tag = 'scoped memory for unetcat_forward.2']
    %7 = vsyncpa [#allocation3], 0
    %s8 = scalar_lea.sflag [#allocation3], 1
    %9 = vsyncpa %s8, 0
    %10 = vsyncpa [#allocation5], 0
    loop: start=0, step=1, limit=6
    $region2: #{unetcat_forward.2} parent=1 // loop_pre_header
      _
    $region3: #{unetcat_forward.2} parent=1 // loop_header
      %s12 = sphi 0, %s16
      %p13 = scmp.ge.s32.totalorder %s12, 6
      %s19 = sphi 0, %s31
      %s20 = sphi 0, %s27
      %s21 = sphi 0, %s19
      %s22 = sphi 0, %s20
      %s23 = sphi 0, %s21
      %s24 = sphi 0, %s22
      %s36 = sphi 0, %s38
      %s39 = sphi 0, %s36
      %s40 = sphi 0, %s39
      %s56 = sphi 0, %s40
      %s60 = sphi 0, %s60
      %s62 = sphi 0, %s60
      %s63 = sphi 0, %s62
      %s77 = sphi 0, %s63
      %s83 = sphi 0, %s85
      %s86 = sphi 0, %s83
      %s87 = sphi 0, %s86
      %s103 = sphi 0, %s87
    $region4: #{unetcat_forward.2} parent=1 // loop_header_branch
      %15 = sbr.rel (%p13) target = $region8
    $region5: #{unetcat_forward.2} parent=1 // loop_body
      %s17 = ssub.s32 %s12, 1
      %s18 = ssub.s32 %s12, 2
      %s25 = sadd.s32 1, %s20
      %p26 = scmp.ge.s32.totalorder %s25, 2
      %s27 = scalar_select %p26, 0, %s25
      %s28 = sadd.s32 1, %s19
      %s29 = scalar_select %p26, %s28, %s19
      %p30 = scmp.ge.s32.totalorder %s29, 2
      %s31 = scalar_select %p30, 0, %s29
      %s32 = ssub.s32 %s19, %s31
      %s33 = ssub.s32 %s20, %s27
      %s34 = sor.u32 %s32, %s33
      %p35 = scmp.eq.s32.totalorder %s34, 0
      %s37 = sadd.s32 %s36, 1
      %s38 = scalar_select %p35, %s36, %s37
      %p41 = pneg %p35
      %p42 = scmp.eq.s32.totalorder %s12, 3
      %p43 = por %p41, %p42
      %p44 = scmp.ne.s32.totalorder %s36, %s39
      %p45 = scmp.eq.s32.totalorder %s12, 0
      %p46 = por %p44, %p45
      %p47 = scmp.ne.s32.totalorder %s36, %s39
      %p48 = scmp.eq.s32.totalorder %s17, 3
      %p49 = por %p47, %p48
      %p50 = scmp.ne.s32.totalorder %s39, %s40
      %p51 = scmp.eq.s32.totalorder %s17, 0
      %p52 = por %p50, %p51
      %p53 = scmp.ne.s32.totalorder %s39, %s40
      %p54 = scmp.eq.s32.totalorder %s18, 3
      %p55 = por %p53, %p54
      %p57 = scmp.ne.s32.totalorder %s40, %s56
      %p58 = scmp.eq.s32.totalorder %s18, 0
      %p59 = por %p57, %p58
      %s61 = sadd.s32 %s60, 1
      %p64 = scmp.eq.s32.totalorder %s12, 3
      %p65 = scmp.ne.s32.totalorder %s60, %s62
      %p66 = scmp.eq.s32.totalorder %s12, 0
      %p67 = por %p65, %p66
      %p68 = scmp.ne.s32.totalorder %s60, %s62
      %p69 = scmp.eq.s32.totalorder %s17, 3
      %p70 = por %p68, %p69
      %p71 = scmp.ne.s32.totalorder %s62, %s63
      %p72 = scmp.eq.s32.totalorder %s17, 0
      %p73 = por %p71, %p72
      %p74 = scmp.ne.s32.totalorder %s62, %s63
      %p75 = scmp.eq.s32.totalorder %s18, 3
      %p76 = por %p74, %p75
      %p78 = scmp.ne.s32.totalorder %s63, %s77
      %p79 = scmp.eq.s32.totalorder %s18, 0
      %p80 = por %p78, %p79
      %s81 = ssub.s32 %s19, %s31
      %p82 = scmp.eq.s32.totalorder %s81, 0
      %s84 = sadd.s32 %s83, 1
      %s85 = scalar_select %p82, %s83, %s84
      %p88 = pneg %p82
      %p89 = scmp.eq.s32.totalorder %s12, 3
      %p90 = por %p88, %p89
      %p91 = scmp.ne.s32.totalorder %s83, %s86
      %p92 = scmp.eq.s32.totalorder %s12, 0
      %p93 = por %p91, %p92
      %p94 = scmp.ne.s32.totalorder %s83, %s86
      %p95 = scmp.eq.s32.totalorder %s17, 3
      %p96 = por %p94, %p95
      %p97 = scmp.ne.s32.totalorder %s86, %s87
      %p98 = scmp.eq.s32.totalorder %s17, 0
      %p99 = por %p97, %p98
      %p100 = scmp.ne.s32.totalorder %s86, %s87
      %p101 = scmp.eq.s32.totalorder %s18, 3
      %p102 = por %p100, %p101
      %p104 = scmp.ne.s32.totalorder %s87, %s103
      %p105 = scmp.eq.s32.totalorder %s18, 0
      %p106 = por %p104, %p105
      %p107 = scmp.le.s32.totalorder 1, %s12
      %p108 = scmp.lt.s32.totalorder %s12, 5
      %p109 = pnand %p107, %p108
      %p110 = pneg %p109
      // Predicated region
      $region9: #{unetcat_forward.2} parent=5 // pred_check
        _
      $region10: #{unetcat_forward.2} parent=5 // pred_check_branch
        %112 = sbr.rel (%p109) target = $region12
      $region11: #{unetcat_forward.2} parent=5 // pred_region
        %s113 = ssub.s32 %s12, 1
        // Predicated region
        $region13: #{unetcat_forward.2} parent=11 // pred_check
          %p114 = pneg %p73
        $region14: #{unetcat_forward.2} parent=11 // pred_check_branch
          %116 = sbr.rel (%p114) target = $region16
        $region15: #{unetcat_forward.2} parent=11 // pred_region
          %s118 = ssub.s32 1024, 1024
          %119 = vsyncadd [#allocation5], %s118
          %s120 = sshll.u32 [#allocation4], 4
          %s121 = int_to_ptr.vmem [resolvable:$true] %s120
          %126 = dma.hbm_to_vmem [thread:$0]  %s1, 1024, %s121, [#allocation5], 128, 128, 8
        $region16: #{unetcat_forward.2} parent=11 // pred_fallthru
          _
      $region12: #{unetcat_forward.2} parent=5 // pred_fallthru
        _
      %p127 = scmp.lt.s32.totalorder %s12, 4
      // Predicated region
      $region17: #{unetcat_forward.2} parent=5 // pred_check
        %p128 = pneg %p127
      $region18: #{unetcat_forward.2} parent=5 // pred_check_branch
        %130 = sbr.rel (%p128) target = $region20
      $region19: #{unetcat_forward.2} parent=5 // pred_region
        // Predicated region
        $region21: #{unetcat_forward.2} parent=19 // pred_check
          %p131 = pneg %p46
        $region22: #{unetcat_forward.2} parent=19 // pred_check_branch
          %133 = sbr.rel (%p131) target = $region24
        $region23: #{unetcat_forward.2} parent=19 // pred_region
          %s134 = sand.u32 %s36, 1
          %s135 = scalar_lea.sflag [#allocation3], %s134
          %s136 = sand.u32 %s36, 1
          %s137 = smul.addr %s136, 128
          %s138 = scalar_lea.vmem [#allocation2], %s137
          %s139 = smul.u32 16, %s20
          %s141 = ssub.s32 2048, 2048
          %142 = vsyncadd %s135, %s141
          %s143 = smul.addr %s19, 32
          %s144 = sadd.s32 %s139, %s143
          %s145 = smul.addr %s144, 128
          %s146 = scalar_lea.hbm %s0, %s145
          %s147 = sshll.u32 %s138, 4
          %s148 = int_to_ptr.vmem [resolvable:$true] %s147
          %153 = dma.hbm_to_vmem [thread:$0]  %s146, 2048, %s148, %s135, 128, 128, 8
        $region24: #{unetcat_forward.2} parent=19 // pred_fallthru
          _
      $region20: #{unetcat_forward.2} parent=5 // pred_fallthru
        _
      %p154 = scmp.le.s32.totalorder 1, %s12
      %p155 = scmp.lt.s32.totalorder %s12, 5
      %p156 = pnand %p154, %p155
      %p157 = pneg %p156
      // Predicated region
      $region25: #{unetcat_forward.2} parent=5 // pred_check
        _
      $region26: #{unetcat_forward.2} parent=5 // pred_check_branch
        %159 = sbr.rel (%p156) target = $region28
      $region27: #{unetcat_forward.2} parent=5 // pred_region
        %s160 = ssub.s32 %s12, 1
        %s161 = sand.u32 %s39, 1
        %s162 = scalar_lea.sflag [#allocation3], %s161
        %s163 = sand.u32 %s39, 1
        %s164 = smul.addr %s163, 128
        %s165 = scalar_lea.vmem [#allocation2], %s164
        // Predicated region
        $region29: #{unetcat_forward.2} parent=27 // pred_check
          %p166 = pneg %p52
        $region30: #{unetcat_forward.2} parent=27 // pred_check_branch
          %168 = sbr.rel (%p166) target = $region32
        $region31: #{unetcat_forward.2} parent=27 // pred_region
          %169 = dma.done %s162, 2048
        $region32: #{unetcat_forward.2} parent=27 // pred_fallthru
          _
        // Predicated region
        $region33: #{unetcat_forward.2} parent=27 // pred_check
          %p170 = pneg %p73
        $region34: #{unetcat_forward.2} parent=27 // pred_check_branch
          %172 = sbr.rel (%p170) target = $region36
        $region35: #{unetcat_forward.2} parent=27 // pred_region
          %173 = dma.done [#allocation5], 1024
        $region36: #{unetcat_forward.2} parent=27 // pred_fallthru
          _
        %s174 = sand.u32 %s39, 1
        %s175 = scalar_lea.sflag [#allocation3], %s174
        %s176 = sand.u32 %s39, 1
        %s177 = smul.addr %s176, 128
        %s178 = scalar_lea.vmem [#allocation2], %s177
        %p179 = pneg %p52
        %p180 = pneg %p49
        %p181 = pneg %p73
        %p182 = pneg %p70
        %p183 = pneg %p99
        %p184 = pneg %p96
        %p185 = scmp.lt.s32.totalorder %s21, 1
        %s186 = scalar_select %p185, %s21, 1
        %s187 = smul.addr %s186, 2
        %s188 = scalar_lea.vmem %s2, %s187
        %s189 = smul.u32 16, %s22
        %p190 = scmp.lt.s32.totalorder %s21, 1
        %s191 = scalar_select %p190, %s21, 1
        %s192 = smul.addr %s191, 2
        %s193 = scalar_lea.vmem %s2, %s192
        %p194 = scmp.eq.s32.totalorder %s22, 0
        // Predicated region
        $region37: #{unetcat_forward.2} parent=27 // pred_check
          %p195 = pneg %p194
        $region38: #{unetcat_forward.2} parent=27 // pred_check_branch
          %197 = sbr.rel (%p195) target = $region40
        $region39: #{unetcat_forward.2} parent=27 // pred_region
          %vm198 = vcmask 517120
          %199 = vst.msk [vmem:[%s193] sm:$0x3] %vm198, 0.0
        $region40: #{unetcat_forward.2} parent=27 // pred_fallthru
          _
        %v200 = vld [vmem:[%s165] sm:$0xff]
        %v201 = vld [vmem:[%s165 + $0x8] sm:$0xff]
        %v202 = vld [vmem:[%s165 + $0x10] sm:$0xff]
        %v203 = vld [vmem:[%s165 + $0x18] sm:$0xff]
        %v204 = vld [vmem:[%s165 + $0x20] sm:$0xff]
        %v205 = vld [vmem:[%s165 + $0x28] sm:$0xff]
        %v206 = vld [vmem:[%s165 + $0x30] sm:$0xff]
        %v207 = vld [vmem:[%s165 + $0x38] sm:$0xff]
        %v208 = vld [vmem:[%s165 + $0x40] sm:$0xff]
        %v209 = vld [vmem:[%s165 + $0x48] sm:$0xff]
        %v210 = vld [vmem:[%s165 + $0x50] sm:$0xff]
        %v211 = vld [vmem:[%s165 + $0x58] sm:$0xff]
        %v212 = vld [vmem:[%s165 + $0x60] sm:$0xff]
        %v213 = vld [vmem:[%s165 + $0x68] sm:$0xff]
        %v214 = vld [vmem:[%s165 + $0x70] sm:$0xff]
        %v215 = vld [vmem:[%s165 + $0x78] sm:$0xff]
        %v216 = vld [vmem:[#allocation4] sm:$0xff]
        %v217 = vld [vmem:[#allocation4 + $0x8] sm:$0xff]
        %v218 = vld [vmem:[#allocation4 + $0x10] sm:$0xff]
        %v219 = vld [vmem:[#allocation4 + $0x18] sm:$0xff]
        %v220 = vld [vmem:[#allocation4 + $0x20] sm:$0xff]
        %v221 = vld [vmem:[#allocation4 + $0x28] sm:$0xff]
        %v222 = vld [vmem:[#allocation4 + $0x30] sm:$0xff]
        %v223 = vld [vmem:[#allocation4 + $0x38] sm:$0xff]
        %vm224 = vcmask 523264
        %v226 = vsel %vm224, %v200, 0
        %v229 = vsel %vm224, %v201, 0
        %v232 = vsel %vm224, %v202, 0
        %v235 = vsel %vm224, %v203, 0
        %v238 = vsel %vm224, %v204, 0
        %v241 = vsel %vm224, %v205, 0
        %v244 = vsel %vm224, %v206, 0
        %v247 = vsel %vm224, %v207, 0
        %v250 = vsel %vm224, %v208, 0
        %v253 = vsel %vm224, %v209, 0
        %v256 = vsel %vm224, %v210, 0
        %v259 = vsel %vm224, %v211, 0
        %v262 = vsel %vm224, %v212, 0
        %v265 = vsel %vm224, %v213, 0
        %v268 = vsel %vm224, %v214, 0
        %v271 = vsel %vm224, %v215, 0
        %273 = vmatprep.subr.mxu0 0.0
        %274 = vmatpush1.msra.mxu0 0.0
        %275 = vmatprep.subr.mxu0 0.0
        %276 = vmatpush1.msra.mxu0 0.0
        %277 = vmatprep.subr.mxu0 0.0
        %278 = vmatpush1.msra.mxu0 0.0
        %279 = vmatprep.subr.mxu0 0.0
        %280 = vmatpush1.msra.mxu0 0.0
        %281 = vmatprep.subr.mxu0 0.0
        %282 = vmatpush1.msra.mxu0 0.0
        %283 = vmatprep.subr.mxu0 0.0
        %284 = vmatpush1.msra.mxu0 0.0
        %285 = vmatprep.subr.mxu0 0.0
        %286 = vmatpush1.msra.mxu0 0.0
        %287 = vmatprep.subr.mxu0 0.0
        %288 = vmatpush1.msra.mxu0 0.0
        %289 = vmatprep.subr.mxu0 0.0
        %290 = vmatpush1.msra.mxu0 %v223
        %291 = vmatprep.subr.mxu0 0.0
        %292 = vmatpush1.msra.mxu0 %v222
        %293 = vmatprep.subr.mxu0 0.0
        %294 = vmatpush1.msra.mxu0 %v221
        %295 = vmatprep.subr.mxu0 0.0
        %296 = vmatpush1.msra.mxu0 %v220
        %297 = vmatprep.subr.mxu0 0.0
        %298 = vmatpush1.msra.mxu0 %v219
        %299 = vmatprep.subr.mxu0 0.0
        %300 = vmatpush1.msra.mxu0 %v218
        %301 = vmatprep.subr.mxu0 0.0
        %302 = vmatpush1.msra.mxu0 %v217
        %303 = vmatprep.subr.mxu0 0.0
        %304 = vmatpush1.msra.mxu0 %v216
        %305 = vmatprep.subr.mxu0 0.0
        %306 = vmatpush2.msra.mxu0 0.0
        %307 = vmatprep.subr.mxu0 0.0
        %308 = vmatpush2.msra.mxu0 0.0
        %309 = vmatprep.subr.mxu0 0.0
        %310 = vmatpush2.msra.mxu0 0.0
        %311 = vmatprep.subr.mxu0 0.0
        %312 = vmatpush2.msra.mxu0 0.0
        %313 = vmatprep.subr.mxu0 0.0
        %314 = vmatpush2.msra.mxu0 0.0
        %315 = vmatprep.subr.mxu0 0.0
        %316 = vmatpush2.msra.mxu0 0.0
        %317 = vmatprep.subr.mxu0 0.0
        %318 = vmatpush2.msra.mxu0 0.0
        %319 = vmatprep.subr.mxu0 0.0
        %320 = vmatpush2.msra.mxu0 0.0
        %321 = vmatprep.subr.mxu0 0.0
        %322 = vmatpush2.msra.mxu0 0.0
        %323 = vmatprep.subr.mxu0 0.0
        %324 = vmatpush2.msra.mxu0 0.0
        %325 = vmatprep.subr.mxu0 0.0
        %326 = vmatpush2.msra.mxu0 0.0
        %327 = vmatprep.subr.mxu0 0.0
        %328 = vmatpush2.msra.mxu0 0.0
        %329 = vmatprep.subr.mxu0 0.0
        %330 = vmatpush2.msra.mxu0 0.0
        %331 = vmatprep.subr.mxu0 0.0
        %332 = vmatpush2.msra.mxu0 0.0
        %333 = vmatprep.subr.mxu0 0.0
        %334 = vmatpush2.msra.mxu0 0.0
        %335 = vmatprep.subr.mxu0 0.0
        %336 = vmatpush2.msra.mxu0 0.0
        %337 = vmatprep.mubr.f32.mxu0 0.0
        %338 = vmatmul.mubr.f32.gmra.mxu0 %v226
        %v339 = vpop.f32.mrf.mxu0
        %v340 = vadd.f32 0.0, %v339
        %v341 = vpop.f32.mrf.mxu0
        %342 = vmatprep.mubr.f32.mxu0 0.0
        %343 = vmatmul.mubr.f32.gmra.mxu0 %v229
        %v344 = vpop.f32.mrf.mxu0
        %v345 = vadd.f32 0.0, %v344
        %v346 = vpop.f32.mrf.mxu0
        %347 = vmatprep.mubr.f32.mxu0 0.0
        %348 = vmatmul.mubr.f32.gmra.mxu0 %v232
        %v349 = vpop.f32.mrf.mxu0
        %v350 = vadd.f32 0.0, %v349
        %v351 = vpop.f32.mrf.mxu0
        %352 = vmatprep.mubr.f32.mxu0 0.0
        %353 = vmatmul.mubr.f32.gmra.mxu0 %v235
        %v354 = vpop.f32.mrf.mxu0
        %v355 = vadd.f32 0.0, %v354
        %v356 = vpop.f32.mrf.mxu0
        %357 = vmatprep.mubr.f32.mxu0 0.0
        %358 = vmatmul.mubr.f32.gmra.mxu0 %v238
        %v359 = vpop.f32.mrf.mxu0
        %v360 = vadd.f32 0.0, %v359
        %v361 = vpop.f32.mrf.mxu0
        %362 = vmatprep.mubr.f32.mxu0 0.0
        %363 = vmatmul.mubr.f32.gmra.mxu0 %v241
        %v364 = vpop.f32.mrf.mxu0
        %v365 = vadd.f32 0.0, %v364
        %v366 = vpop.f32.mrf.mxu0
        %367 = vmatprep.mubr.f32.mxu0 0.0
        %368 = vmatmul.mubr.f32.gmra.mxu0 %v244
        %v369 = vpop.f32.mrf.mxu0
        %v370 = vadd.f32 0.0, %v369
        %v371 = vpop.f32.mrf.mxu0
        %372 = vmatprep.mubr.f32.mxu0 0.0
        %373 = vmatmul.mubr.f32.gmra.mxu0 %v247
        %v374 = vpop.f32.mrf.mxu0
        %v375 = vadd.f32 0.0, %v374
        %v376 = vpop.f32.mrf.mxu0
        %377 = vmatprep.mubr.f32.mxu0 0.0
        %378 = vmatmul.mubr.f32.gmra.mxu0 %v250
        %v379 = vpop.f32.mrf.mxu0
        %v380 = vadd.f32 0.0, %v379
        %v381 = vpop.f32.mrf.mxu0
        %382 = vmatprep.mubr.f32.mxu0 0.0
        %383 = vmatmul.mubr.f32.gmra.mxu0 %v253
        %v384 = vpop.f32.mrf.mxu0
        %v385 = vadd.f32 0.0, %v384
        %v386 = vpop.f32.mrf.mxu0
        %387 = vmatprep.mubr.f32.mxu0 0.0
        %388 = vmatmul.mubr.f32.gmra.mxu0 %v256
        %v389 = vpop.f32.mrf.mxu0
        %v390 = vadd.f32 0.0, %v389
        %v391 = vpop.f32.mrf.mxu0
        %392 = vmatprep.mubr.f32.mxu0 0.0
        %393 = vmatmul.mubr.f32.gmra.mxu0 %v259
        %v394 = vpop.f32.mrf.mxu0
        %v395 = vadd.f32 0.0, %v394
        %v396 = vpop.f32.mrf.mxu0
        %397 = vmatprep.mubr.f32.mxu0 0.0
        %398 = vmatmul.mubr.f32.gmra.mxu0 %v262
        %v399 = vpop.f32.mrf.mxu0
        %v400 = vadd.f32 0.0, %v399
        %v401 = vpop.f32.mrf.mxu0
        %402 = vmatprep.mubr.f32.mxu0 0.0
        %403 = vmatmul.mubr.f32.gmra.mxu0 %v265
        %v404 = vpop.f32.mrf.mxu0
        %v405 = vadd.f32 0.0, %v404
        %v406 = vpop.f32.mrf.mxu0
        %407 = vmatprep.mubr.f32.mxu0 0.0
        %408 = vmatmul.mubr.f32.gmra.mxu0 %v268
        %v409 = vpop.f32.mrf.mxu0
        %v410 = vadd.f32 0.0, %v409
        %v411 = vpop.f32.mrf.mxu0
        %412 = vmatprep.mubr.f32.mxu0 0.0
        %413 = vmatmul.mubr.f32.gmra.mxu0 %v271
        %v414 = vpop.f32.mrf.mxu0
        %v415 = vadd.f32 0.0, %v414
        %v416 = vpop.f32.mrf.mxu0
        %417 = vdwg.mxu0
        %v418 = vsel %vm224, %v340, 0.0
        %v419 = vsel %vm224, %v345, 0.0
        %v420 = vadd.f32 %v418, %v419
        %v421 = vsel %vm224, %v350, 0.0
        %v422 = vadd.f32 %v420, %v421
        %v423 = vsel %vm224, %v355, 0.0
        %v424 = vadd.f32 %v422, %v423
        %v425 = vsel %vm224, %v360, 0.0
        %v426 = vadd.f32 %v424, %v425
        %v427 = vsel %vm224, %v365, 0.0
        %v428 = vadd.f32 %v426, %v427
        %v429 = vsel %vm224, %v370, 0.0
        %v430 = vadd.f32 %v428, %v429
        %v431 = vsel %vm224, %v375, 0.0
        %v432 = vadd.f32 %v430, %v431
        %v433 = vsel %vm224, %v380, 0.0
        %v434 = vadd.f32 %v432, %v433
        %v435 = vsel %vm224, %v385, 0.0
        %v436 = vadd.f32 %v434, %v435
        %v437 = vsel %vm224, %v390, 0.0
        %v438 = vadd.f32 %v436, %v437
        %v439 = vsel %vm224, %v395, 0.0
        %v440 = vadd.f32 %v438, %v439
        %v441 = vsel %vm224, %v400, 0.0
        %v442 = vadd.f32 %v440, %v441
        %v443 = vsel %vm224, %v405, 0.0
        %v444 = vadd.f32 %v442, %v443
        %v445 = vsel %vm224, %v410, 0.0
        %v446 = vadd.f32 %v444, %v445
        %v447 = vsel %vm224, %v415, 0.0
        %v448 = vadd.f32 %v446, %v447
        %v449 = vrot.slane %v448, 4
        %v450 = vadd.f32 %v448, %v449
        %v451 = vrot.slane %v450, 2
        %v452 = vadd.f32 %v450, %v451
        %v453 = vrot.slane %v452, 1
        %v454 = vadd.f32 %v452, %v453
        %v455 = vmul.f32 %v340, %v340
        %v456 = vmul.f32 %v345, %v345
        %v457 = vmul.f32 %v350, %v350
        %v458 = vmul.f32 %v355, %v355
        %v459 = vmul.f32 %v360, %v360
        %v460 = vmul.f32 %v365, %v365
        %v461 = vmul.f32 %v370, %v370
        %v462 = vmul.f32 %v375, %v375
        %v463 = vmul.f32 %v380, %v380
        %v464 = vmul.f32 %v385, %v385
        %v465 = vmul.f32 %v390, %v390
        %v466 = vmul.f32 %v395, %v395
        %v467 = vmul.f32 %v400, %v400
        %v468 = vmul.f32 %v405, %v405
        %v469 = vmul.f32 %v410, %v410
        %v470 = vmul.f32 %v415, %v415
        %v471 = vsel %vm224, %v455, 0.0
        %v472 = vsel %vm224, %v456, 0.0
        %v473 = vadd.f32 %v471, %v472
        %v474 = vsel %vm224, %v457, 0.0
        %v475 = vadd.f32 %v473, %v474
        %v476 = vsel %vm224, %v458, 0.0
        %v477 = vadd.f32 %v475, %v476
        %v478 = vsel %vm224, %v459, 0.0
        %v479 = vadd.f32 %v477, %v478
        %v480 = vsel %vm224, %v460, 0.0
        %v481 = vadd.f32 %v479, %v480
        %v482 = vsel %vm224, %v461, 0.0
        %v483 = vadd.f32 %v481, %v482
        %v484 = vsel %vm224, %v462, 0.0
        %v485 = vadd.f32 %v483, %v484
        %v486 = vsel %vm224, %v463, 0.0
        %v487 = vadd.f32 %v485, %v486
        %v488 = vsel %vm224, %v464, 0.0
        %v489 = vadd.f32 %v487, %v488
        %v490 = vsel %vm224, %v465, 0.0
        %v491 = vadd.f32 %v489, %v490
        %v492 = vsel %vm224, %v466, 0.0
        %v493 = vadd.f32 %v491, %v492
        %v494 = vsel %vm224, %v467, 0.0
        %v495 = vadd.f32 %v493, %v494
        %v496 = vsel %vm224, %v468, 0.0
        %v497 = vadd.f32 %v495, %v496
        %v498 = vsel %vm224, %v469, 0.0
        %v499 = vadd.f32 %v497, %v498
        %v500 = vsel %vm224, %v470, 0.0
        %v501 = vadd.f32 %v499, %v500
        %v502 = vrot.slane %v501, 4
        %v503 = vadd.f32 %v501, %v502
        %v504 = vrot.slane %v503, 2
        %v505 = vadd.f32 %v503, %v504
        %v506 = vrot.slane %v505, 1
        %v507 = vadd.f32 %v505, %v506
        %v508 = vld [vmem:[%s193] sm:$0x3]
        %vm509 = vcmask 1040384
        %v510 = vsel %vm509, %v454, %v507
        %v511 = vadd.f32 %v508, %v510
        %vm512 = vcmask 517120
        %513 = vst.msk [vmem:[%s193] sm:$0x3] %vm512, %v511
        %p514 = scmp.eq.s32.totalorder %s22, 1
        // Predicated region
        $region41: #{unetcat_forward.2} parent=27 // pred_check
          %p515 = pneg %p514
        $region42: #{unetcat_forward.2} parent=27 // pred_check_branch
          %517 = sbr.rel (%p515) target = $region44
        $region43: #{unetcat_forward.2} parent=27 // pred_region
          %v518 = vld [vmem:[%s193] sm:$0x3]
          %v519 = vmul.f32 %v518, 0.00390625
          %v520 = vmul.f32 %v519, %v519
          %v522 = vrot.slane %v520, 7
          %v524 = vsub.f32 %v519, %v522
          %v525 = vadd.f32 %v524, 1e-05
          %v526 = vrsqrt.pop %v525
          %v527 = vsel %vm509, %v519, %v526
          %528 = vst.msk [vmem:[%s193] sm:$0x3] %vm512, %v527
        $region44: #{unetcat_forward.2} parent=27 // pred_fallthru
          _
        %p529 = scmp.lt.s32.totalorder %s21, 1
        %s530 = scalar_select %p529, %s21, 1
        %s531 = smul.addr %s530, 2
        %s532 = scalar_lea.vmem %s2, %s531
        // Predicated region
        $region45: #{unetcat_forward.2} parent=27 // pred_check
          %p533 = pneg %p96
        $region46: #{unetcat_forward.2} parent=27 // pred_check_branch
          %535 = sbr.rel (%p533) target = $region48
        $region47: #{unetcat_forward.2} parent=27 // pred_region
          _
        $region48: #{unetcat_forward.2} parent=27 // pred_fallthru
          _
      $region28: #{unetcat_forward.2} parent=5 // pred_fallthru
        _
      %p536 = scmp.le.s32.totalorder 2, %s12
      // Predicated region
      $region49: #{unetcat_forward.2} parent=5 // pred_check
        %p537 = pneg %p536
      $region50: #{unetcat_forward.2} parent=5 // pred_check_branch
        %539 = sbr.rel (%p537) target = $region52
      $region51: #{unetcat_forward.2} parent=5 // pred_region
        %s540 = ssub.s32 %s12, 2
        // Predicated region
        $region53: #{unetcat_forward.2} parent=51 // pred_check
          %p541 = pneg %p102
        $region54: #{unetcat_forward.2} parent=51 // pred_check_branch
          %543 = sbr.rel (%p541) target = $region56
        $region55: #{unetcat_forward.2} parent=51 // pred_region
          %p544 = scmp.lt.s32.totalorder %s23, 1
          %s545 = scalar_select %p544, %s23, 1
          %s546 = smul.addr %s545, 2
          %s547 = scalar_lea.vmem %s2, %s546
        $region56: #{unetcat_forward.2} parent=51 // pred_fallthru
          _
      $region52: #{unetcat_forward.2} parent=5 // pred_fallthru
        _
    $region6: #{unetcat_forward.2} parent=1 // loop_footer
      %s16 = sadd.s32 1, %s12
    $region7: #{unetcat_forward.2} parent=1 // loop_footer_branch
      %11 = sbr.rel target = $region3
    $region8: #{unetcat_forward.2} parent=1 // loop_exit
      _
    %548 = vsyncpa [#allocation3], 1
    %s549 = scalar_lea.sflag [#allocation3], 1
    %550 = vsyncpa %s549, 1
    %551 = vsyncpa [#allocation5], 1

// kernel: unetcat_forward.3
$region0: #{unetcat_forward.3}
  #allocation0 [shape = 'u32[]', space=smem, size = 0x4, offset = 0x4, fixed_abs, tag = 'smem constant byte address 0x4 - core index']
  #allocation1 [shape = 'u32[144,128]{1,0:T(1,128)}', space=vmem, size = 0x12000, scoped, tag = 'internal scratch']
  %s0 = inlined_call_operand.vmem [shape: f32[2,256,64], index: 0, kind: input, shape index: {}]
  %s1 = inlined_call_operand.hbm [shape: f32[2,256,64], index: 1, kind: input, shape index: {}]
  %s2 = inlined_call_operand.vmem [shape: f32[64,64], index: 2, kind: input, shape index: {}]
  %s3 = inlined_call_operand.hbm [shape: f32[64,64], index: 3, kind: input, shape index: {}]
  %s4 = inlined_call_operand.vmem [shape: f32[2,2,64], index: 4, kind: input, shape index: {}]
  %s5 = inlined_call_operand.hbm [shape: f32[2,256,128], index: 5, kind: output, shape index: {}]
  %s6 = sld [smem:[#allocation0]]
  $region61: #{unetcat_forward.3} parent=0
    _
  %s8 = ssub.s32 1, %s6
  %s9 = scalar_select 0, %s8, %s6
  $region1: #{unetcat_forward.3} parent=0
    #allocation2 [shape = 'u8[131072]{0}', space=vmem, size = 0x20000, scoped, tag = 'input window, operand 1']
    #allocation3 [shape = 's32[2]{0}', space=sflag, size = 0x8, scoped, tag = 'scoped memory for unetcat_forward.3']
    #allocation4 [shape = 's32[2]{0}', space=sflag, size = 0x8, scoped, tag = 'scoped memory for unetcat_forward.3']
    #allocation5 [shape = 'u8[32768]{0}', space=vmem, size = 0x8000, scoped, tag = 'input window, operand 3, single buffered']
    #allocation6 [shape = 's32[1]{0}', space=sflag, size = 0x4, scoped, tag = 'scoped memory for unetcat_forward.3']
    #allocation7 [shape = 'u8[131072]{0}', space=vmem, size = 0x20000, scoped, tag = 'output window, operand 0']
    %10 = vsyncpa [#allocation3], 0
    %s11 = scalar_lea.sflag [#allocation3], 1
    %12 = vsyncpa %s11, 0
    %13 = vsyncpa [#allocation6], 0
    %14 = vsyncpa [#allocation4], 0
    %s15 = scalar_lea.sflag [#allocation4], 1
    %16 = vsyncpa %s15, 0
    loop: start=0, step=1, limit=6
    $region2: #{unetcat_forward.3} parent=1 // loop_pre_header
      _
    $region3: #{unetcat_forward.3} parent=1 // loop_header
      %s18 = sphi 0, %s22
      %p19 = scmp.ge.s32.totalorder %s18, 6
      %s25 = sphi 0, %s37
      %s26 = sphi 0, %s33
      %s27 = sphi 0, %s25
      %s28 = sphi 0, %s26
      %s29 = sphi 0, %s27
      %s30 = sphi 0, %s28
      %s42 = sphi 0, %s44
      %s45 = sphi 0, %s42
      %s46 = sphi 0, %s45
      %s62 = sphi 0, %s46
      %s70 = sphi 0, %s72
      %s73 = sphi 0, %s70
      %s74 = sphi 0, %s73
      %s90 = sphi 0, %s74
      %s94 = sphi 0, %s94
      %s96 = sphi 0, %s94
      %s97 = sphi 0, %s96
      %s111 = sphi 0, %s97
      %s115 = sphi 0, %s115
      %s117 = sphi 0, %s115
      %s118 = sphi 0, %s117
      %s132 = sphi 0, %s118
      %s138 = sphi 0, %s140
      %s141 = sphi 0, %s138
      %s142 = sphi 0, %s141
      %s158 = sphi 0, %s142
      %s166 = sphi 0, %s168
      %s169 = sphi 0, %s166
      %s170 = sphi 0, %s169
      %s186 = sphi 0, %s170
    $region4: #{unetcat_forward.3} parent=1 // loop_header_branch
      %21 = sbr.rel (%p19) target = $region8
    $region5: #{unetcat_forward.3} parent=1 // loop_body
      %s23 = ssub.s32 %s18, 1
      %s24 = ssub.s32 %s18, 2
      %s31 = sadd.s32 1, %s26
      %p32 = scmp.ge.s32.totalorder %s31, 2
      %s33 = scalar_select %p32, 0, %s31
      %s34 = sadd.s32 1, %s25
      %s35 = scalar_select %p32, %s34, %s25
      %p36 = scmp.ge.s32.totalorder %s35, 2
      %s37 = scalar_select %p36, 0, %s35
      %s38 = ssub.s32 %s25, %s37
      %s39 = ssub.s32 %s26, %s33
      %s40 = sor.u32 %s38, %s39
      %p41 = scmp.eq.s32.totalorder %s40, 0
      %s43 = sadd.s32 %s42, 1
      %s44 = scalar_select %p41, %s42, %s43
      %p47 = pneg %p41
      %p48 = scmp.eq.s32.totalorder %s18, 3
      %p49 = por %p47, %p48
      %p50 = scmp.ne.s32.totalorder %s42, %s45
      %p51 = scmp.eq.s32.totalorder %s18, 0
      %p52 = por %p50, %p51
      %p53 = scmp.ne.s32.totalorder %s42, %s45
      %p54 = scmp.eq.s32.totalorder %s23, 3
      %p55 = por %p53, %p54
      %p56 = scmp.ne.s32.totalorder %s45, %s46
      %p57 = scmp.eq.s32.totalorder %s23, 0
      %p58 = por %p56, %p57
      %p59 = scmp.ne.s32.totalorder %s45, %s46
      %p60 = scmp.eq.s32.totalorder %s24, 3
      %p61 = por %p59, %p60
      %p63 = scmp.ne.s32.totalorder %s46, %s62
      %p64 = scmp.eq.s32.totalorder %s24, 0
      %p65 = por %p63, %p64
      %s66 = ssub.s32 %s25, %s37
      %s67 = ssub.s32 %s26, %s33
      %s68 = sor.u32 %s66, %s67
      %p69 = scmp.eq.s32.totalorder %s68, 0
      %s71 = sadd.s32 %s70, 1
      %s72 = scalar_select %p69, %s70, %s71
      %p75 = pneg %p69
      %p76 = scmp.eq.s32.totalorder %s18, 3
      %p77 = por %p75, %p76
      %p78 = scmp.ne.s32.totalorder %s70, %s73
      %p79 = scmp.eq.s32.totalorder %s18, 0
      %p80 = por %p78, %p79
      %p81 = scmp.ne.s32.totalorder %s70, %s73
      %p82 = scmp.eq.s32.totalorder %s23, 3
      %p83 = por %p81, %p82
      %p84 = scmp.ne.s32.totalorder %s73, %s74
      %p85 = scmp.eq.s32.totalorder %s23, 0
      %p86 = por %p84, %p85
      %p87 = scmp.ne.s32.totalorder %s73, %s74
      %p88 = scmp.eq.s32.totalorder %s24, 3
      %p89 = por %p87, %p88
      %p91 = scmp.ne.s32.totalorder %s74, %s90
      %p92 = scmp.eq.s32.totalorder %s24, 0
      %p93 = por %p91, %p92
      %s95 = sadd.s32 %s94, 1
      %p98 = scmp.eq.s32.totalorder %s18, 3
      %p99 = scmp.ne.s32.totalorder %s94, %s96
      %p100 = scmp.eq.s32.totalorder %s18, 0
      %p101 = por %p99, %p100
      %p102 = scmp.ne.s32.totalorder %s94, %s96
      %p103 = scmp.eq.s32.totalorder %s23, 3
      %p104 = por %p102, %p103
      %p105 = scmp.ne.s32.totalorder %s96, %s97
      %p106 = scmp.eq.s32.totalorder %s23, 0
      %p107 = por %p105, %p106
      %p108 = scmp.ne.s32.totalorder %s96, %s97
      %p109 = scmp.eq.s32.totalorder %s24, 3
      %p110 = por %p108, %p109
      %p112 = scmp.ne.s32.totalorder %s97, %s111
      %p113 = scmp.eq.s32.totalorder %s24, 0
      %p114 = por %p112, %p113
      %s116 = sadd.s32 %s115, 1
      %p119 = scmp.eq.s32.totalorder %s18, 3
      %p120 = scmp.ne.s32.totalorder %s115, %s117
      %p121 = scmp.eq.s32.totalorder %s18, 0
      %p122 = por %p120, %p121
      %p123 = scmp.ne.s32.totalorder %s115, %s117
      %p124 = scmp.eq.s32.totalorder %s23, 3
      %p125 = por %p123, %p124
      %p126 = scmp.ne.s32.totalorder %s117, %s118
      %p127 = scmp.eq.s32.totalorder %s23, 0
      %p128 = por %p126, %p127
      %p129 = scmp.ne.s32.totalorder %s117, %s118
      %p130 = scmp.eq.s32.totalorder %s24, 3
      %p131 = por %p129, %p130
      %p133 = scmp.ne.s32.totalorder %s118, %s132
      %p134 = scmp.eq.s32.totalorder %s24, 0
      %p135 = por %p133, %p134
      %s136 = ssub.s32 %s25, %s37
      %p137 = scmp.eq.s32.totalorder %s136, 0
      %s139 = sadd.s32 %s138, 1
      %s140 = scalar_select %p137, %s138, %s139
      %p143 = pneg %p137
      %p144 = scmp.eq.s32.totalorder %s18, 3
      %p145 = por %p143, %p144
      %p146 = scmp.ne.s32.totalorder %s138, %s141
      %p147 = scmp.eq.s32.totalorder %s18, 0
      %p148 = por %p146, %p147
      %p149 = scmp.ne.s32.totalorder %s138, %s141
      %p150 = scmp.eq.s32.totalorder %s23, 3
      %p151 = por %p149, %p150
      %p152 = scmp.ne.s32.totalorder %s141, %s142
      %p153 = scmp.eq.s32.totalorder %s23, 0
      %p154 = por %p152, %p153
      %p155 = scmp.ne.s32.totalorder %s141, %s142
      %p156 = scmp.eq.s32.totalorder %s24, 3
      %p157 = por %p155, %p156
      %p159 = scmp.ne.s32.totalorder %s142, %s158
      %p160 = scmp.eq.s32.totalorder %s24, 0
      %p161 = por %p159, %p160
      %s162 = ssub.s32 %s25, %s37
      %s163 = ssub.s32 %s26, %s33
      %s164 = sor.u32 %s162, %s163
      %p165 = scmp.eq.s32.totalorder %s164, 0
      %s167 = sadd.s32 %s166, 1
      %s168 = scalar_select %p165, %s166, %s167
      %p171 = pneg %p165
      %p172 = scmp.eq.s32.totalorder %s18, 3
      %p173 = por %p171, %p172
      %p174 = scmp.ne.s32.totalorder %s166, %s169
      %p175 = scmp.eq.s32.totalorder %s18, 0
      %p176 = por %p174, %p175
      %p177 = scmp.ne.s32.totalorder %s166, %s169
      %p178 = scmp.eq.s32.totalorder %s23, 3
      %p179 = por %p177, %p178
      %p180 = scmp.ne.s32.totalorder %s169, %s170
      %p181 = scmp.eq.s32.totalorder %s23, 0
      %p182 = por %p180, %p181
      %p183 = scmp.ne.s32.totalorder %s169, %s170
      %p184 = scmp.eq.s32.totalorder %s24, 3
      %p185 = por %p183, %p184
      %p187 = scmp.ne.s32.totalorder %s170, %s186
      %p188 = scmp.eq.s32.totalorder %s24, 0
      %p189 = por %p187, %p188
      %p190 = scmp.le.s32.totalorder 1, %s18
      %p191 = scmp.lt.s32.totalorder %s18, 5
      %p192 = pnand %p190, %p191
      %p193 = pneg %p192
      // Predicated region
      $region9: #{unetcat_forward.3} parent=5 // pred_check
        _
      $region10: #{unetcat_forward.3} parent=5 // pred_check_branch
        %195 = sbr.rel (%p192) target = $region12
      $region11: #{unetcat_forward.3} parent=5 // pred_region
        %s196 = ssub.s32 %s18, 1
        // Predicated region
        $region13: #{unetcat_forward.3} parent=11 // pred_check
          %p197 = pneg %p107
        $region14: #{unetcat_forward.3} parent=11 // pred_check_branch
          %199 = sbr.rel (%p197) target = $region16
        $region15: #{unetcat_forward.3} parent=11 // pred_region
          _
        $region16: #{unetcat_forward.3} parent=11 // pred_fallthru
          _
        // Predicated region
        $region17: #{unetcat_forward.3} parent=11 // pred_check
          %p200 = pneg %p128
        $region18: #{unetcat_forward.3} parent=11 // pred_check_branch
          %202 = sbr.rel (%p200) target = $region20
        $region19: #{unetcat_forward.3} parent=11 // pred_region
          %s204 = ssub.s32 1024, 1024
          %205 = vsyncadd [#allocation6], %s204
          %s206 = sshll.u32 [#allocation5], 4
          %s207 = int_to_ptr.vmem [resolvable:$true] %s206
          %212 = dma.hbm_to_vmem [thread:$0]  %s3, 1024, %s207, [#allocation6], 128, 128, 8
        $region20: #{unetcat_forward.3} parent=11 // pred_fallthru
          _
      $region12: #{unetcat_forward.3} parent=5 // pred_fallthru
        _
      %p213 = scmp.lt.s32.totalorder %s18, 4
      // Predicated region
      $region21: #{unetcat_forward.3} parent=5 // pred_check
        %p214 = pneg %p213
      $region22: #{unetcat_forward.3} parent=5 // pred_check_branch
        %216 = sbr.rel (%p214) target = $region24
      $region23: #{unetcat_forward.3} parent=5 // pred_region
        // Predicated region
        $region25: #{unetcat_forward.3} parent=23 // pred_check
          %p217 = pneg %p52
        $region26: #{unetcat_forward.3} parent=23 // pred_check_branch
          %219 = sbr.rel (%p217) target = $region28
        $region27: #{unetcat_forward.3} parent=23 // pred_region
          %s220 = smul.u32 16, %s26
          %p221 = scmp.lt.s32.totalorder %s25, 1
          %s222 = scalar_select %p221, %s25, 1
          %p223 = scmp.lt.s32.totalorder %s220, 31
          %s224 = scalar_select %p223, %s220, 31
          %s225 = smul.addr %s222, 32
          %s226 = sadd.s32 %s224, %s225
          %s227 = smul.addr %s226, 8
          %s228 = scalar_lea.vmem %s0, %s227
          %s229 = smul.u32 16, %s26
        $region28: #{unetcat_forward.3} parent=23 // pred_fallthru
          _
        // Predicated region
        $region29: #{unetcat_forward.3} parent=23 // pred_check
          %p230 = pneg %p80
        $region30: #{unetcat_forward.3} parent=23 // pred_check_branch
          %232 = sbr.rel (%p230) target = $region32
        $region31: #{unetcat_forward.3} parent=23 // pred_region
          %s233 = sand.u32 %s70, 1
          %s234 = scalar_lea.sflag [#allocation3], %s233
          %s235 = sand.u32 %s70, 1
          %s236 = smul.addr %s235, 128
          %s237 = scalar_lea.vmem [#allocation2], %s236
          %s238 = smul.u32 16, %s26
          %s240 = ssub.s32 2048, 2048
          %241 = vsyncadd %s234, %s240
          %s242 = smul.addr %s25, 32
          %s243 = sadd.s32 %s238, %s242
          %s244 = smul.addr %s243, 128
          %s245 = scalar_lea.hbm %s1, %s244
          %s246 = sshll.u32 %s237, 4
          %s247 = int_to_ptr.vmem [resolvable:$true] %s246
          %252 = dma.hbm_to_vmem [thread:$0]  %s245, 2048, %s247, %s234, 128, 128, 8
        $region32: #{unetcat_forward.3} parent=23 // pred_fallthru
          _
        // Predicated region
        $region33: #{unetcat_forward.3} parent=23 // pred_check
          %p253 = pneg %p148
        $region34: #{unetcat_forward.3} parent=23 // pred_check_branch
          %255 = sbr.rel (%p253) target = $region36
        $region35: #{unetcat_forward.3} parent=23 // pred_region
          %p256 = scmp.lt.s32.totalorder %s25, 1
          %s257 = scalar_select %p256, %s25, 1
          %s258 = smul.addr %s257, 2
          %s259 = scalar_lea.vmem %s4, %s258
        $region36: #{unetcat_forward.3} parent=23 // pred_fallthru
          _
      $region24: #{unetcat_forward.3} parent=5 // pred_fallthru
        _
      %p260 = scmp.le.s32.totalorder 1, %s18
      %p261 = scmp.lt.s32.totalorder %s18, 5
      %p262 = pnand %p260, %p261
      %p263 = pneg %p262
      // Predicated region
      $region37: #{unetcat_forward.3} parent=5 // pred_check
        _
      $region38: #{unetcat_forward.3} parent=5 // pred_check_branch
        %265 = sbr.rel (%p262) target = $region40
      $region39: #{unetcat_forward.3} parent=5 // pred_region
        %s266 = ssub.s32 %s18, 1
        %s267 = sand.u32 %s73, 1
        %s268 = scalar_lea.sflag [#allocation3], %s267
        %s269 = sand.u32 %s73, 1
        %s270 = smul.addr %s269, 128
        %s271 = scalar_lea.vmem [#allocation2], %s270
        // Predicated region
        $region41: #{unetcat_forward.3} parent=39 // pred_check
          %p272 = pneg %p86
        $region42: #{unetcat_forward.3} parent=39 // pred_check_branch
          %274 = sbr.rel (%p272) target = $region44
        $region43: #{unetcat_forward.3} parent=39 // pred_region
          %275 = dma.done %s268, 2048
        $region44: #{unetcat_forward.3} parent=39 // pred_fallthru
          _
        // Predicated region
        $region45: #{unetcat_forward.3} parent=39 // pred_check
          %p276 = pneg %p128
        $region46: #{unetcat_forward.3} parent=39 // pred_check_branch
          %278 = sbr.rel (%p276) target = $region48
        $region47: #{unetcat_forward.3} parent=39 // pred_region
          %279 = dma.done [#allocation6], 1024
        $region48: #{unetcat_forward.3} parent=39 // pred_fallthru
          _
        %s280 = smul.u32 16, %s28
        %p281 = scmp.lt.s32.totalorder %s27, 1
        %s282 = scalar_select %p281, %s27, 1
        %p283 = scmp.lt.s32.totalorder %s280, 31
        %s284 = scalar_select %p283, %s280, 31
        %s285 = smul.addr %s282, 32
        %s286 = sadd.s32 %s284, %s285
        %s287 = smul.addr %s286, 8
        %s288 = scalar_lea.vmem %s0, %s287
        %p289 = pneg %p58
        %p290 = pneg %p55
        %s291 = sand.u32 %s73, 1
        %s292 = scalar_lea.sflag [#allocation3], %s291
        %s293 = sand.u32 %s73, 1
        %s294 = smul.addr %s293, 128
        %s295 = scalar_lea.vmem [#allocation2], %s294
        %p296 = pneg %p86
        %p297 = pneg %p83
        %p298 = pneg %p107
        %p299 = pneg %p104
        %p300 = pneg %p128
        %p301 = pneg %p125
        %p302 = scmp.lt.s32.totalorder %s27, 1
        %s303 = scalar_select %p302, %s27, 1
        %s304 = smul.addr %s303, 2
        %s305 = scalar_lea.vmem %s4, %s304
        %p306 = pneg %p154
        %p307 = pneg %p151
        %p308 = pneg %p182
        %p309 = pneg %p179
        %s310 = sand.u32 %s169, 1
        %s311 = scalar_lea.sflag [#allocation4], %s310
        %s312 = sand.u32 %s169, 1
        %s313 = smul.addr %s312, 128
        %s314 = scalar_lea.vmem [#allocation7], %s313
        %s315 = smul.u32 16, %s28
        %p316 = scmp.lt.s32.totalorder %s27, 1
        %s317 = scalar_select %p316, %s27, 1
        %p318 = scmp.lt.s32.totalorder %s315, 31
        %s319 = scalar_select %p318, %s315, 31
        %s320 = smul.addr %s317, 32
        %s321 = sadd.s32 %s319, %s320
        %s322 = smul.addr %s321, 8
        %s323 = scalar_lea.vmem %s0, %s322
        %s324 = smul.u32 16, %s28
        %s325 = smul.u32 16, %s28
        %p326 = scmp.lt.s32.totalorder %s27, 1
        %s327 = scalar_select %p326, %s27, 1
        %s328 = smul.addr %s327, 2
        %s329 = scalar_lea.vmem %s4, %s328
        %s330 = smul.u32 16, %s28
        %v331 = vld [vmem:[%s329] sm:$0x3]
        %v332 = vld [vmem:[%s323] sm:$0xff]
        %v333 = vld [vmem:[%s323 + $0x8] sm:$0xff]
        %v334 = vld [vmem:[%s323 + $0x10] sm:$0xff]
        %v335 = vld [vmem:[%s323 + $0x18] sm:$0xff]
        %v336 = vld [vmem:[%s323 + $0x20] sm:$0xff]
        %v337 = vld [vmem:[%s323 + $0x28] sm:$0xff]
        %v338 = vld [vmem:[%s323 + $0x30] sm:$0xff]
        %v339 = vld [vmem:[%s323 + $0x38] sm:$0xff]
        %v340 = vld [vmem:[%s323 + $0x40] sm:$0xff]
        %v341 = vld [vmem:[%s323 + $0x48] sm:$0xff]
        %v342 = vld [vmem:[%s323 + $0x50] sm:$0xff]
        %v343 = vld [vmem:[%s323 + $0x58] sm:$0xff]
        %v344 = vld [vmem:[%s323 + $0x60] sm:$0xff]
        %v345 = vld [vmem:[%s323 + $0x68] sm:$0xff]
        %v346 = vld [vmem:[%s323 + $0x70] sm:$0xff]
        %v347 = vld [vmem:[%s323 + $0x78] sm:$0xff]
        %v348 = vld [vmem:[%s2] sm:$0xff]
        %v349 = vld [vmem:[%s2 + $0x8] sm:$0xff]
        %v350 = vld [vmem:[%s2 + $0x10] sm:$0xff]
        %v351 = vld [vmem:[%s2 + $0x18] sm:$0xff]
        %v352 = vld [vmem:[%s2 + $0x20] sm:$0xff]
        %v353 = vld [vmem:[%s2 + $0x28] sm:$0xff]
        %v354 = vld [vmem:[%s2 + $0x30] sm:$0xff]
        %v355 = vld [vmem:[%s2 + $0x38] sm:$0xff]
        %vm356 = vcmask 523264
        %v358 = vsel %vm356, %v332, 0
        %v361 = vsel %vm356, %v333, 0
        %v364 = vsel %vm356, %v334, 0
        %v367 = vsel %vm356, %v335, 0
        %v370 = vsel %vm356, %v336, 0
        %v373 = vsel %vm356, %v337, 0
        %v376 = vsel %vm356, %v338, 0
        %v379 = vsel %vm356, %v339, 0
        %v382 = vsel %vm356, %v340, 0
        %v385 = vsel %vm356, %v341, 0
        %v388 = vsel %vm356, %v342, 0
        %v391 = vsel %vm356, %v343, 0
        %v394 = vsel %vm356, %v344, 0
        %v397 = vsel %vm356, %v345, 0
        %v400 = vsel %vm356, %v346, 0
        %v403 = vsel %vm356, %v347, 0
        %405 = vmatprep.subr.mxu0 0.0
        %406 = vmatpush1.msra.mxu0 0.0
        %407 = vmatprep.subr.mxu0 0.0
        %408 = vmatpush1.msra.mxu0 0.0
        %409 = vmatprep.subr.mxu0 0.0
        %410 = vmatpush1.msra.mxu0 0.0
        %411 = vmatprep.subr.mxu0 0.0
        %412 = vmatpush1.msra.mxu0 0.0
        %413 = vmatprep.subr.mxu0 0.0
        %414 = vmatpush1.msra.mxu0 0.0
        %415 = vmatprep.subr.mxu0 0.0
        %416 = vmatpush1.msra.mxu0 0.0
        %417 = vmatprep.subr.mxu0 0.0
        %418 = vmatpush1.msra.mxu0 0.0
        %419 = vmatprep.subr.mxu0 0.0
        %420 = vmatpush1.msra.mxu0 0.0
        %421 = vmatprep.subr.mxu0 0.0
        %422 = vmatpush1.msra.mxu0 %v355
        %423 = vmatprep.subr.mxu0 0.0
        %424 = vmatpush1.msra.mxu0 %v354
        %425 = vmatprep.subr.mxu0 0.0
        %426 = vmatpush1.msra.mxu0 %v353
        %427 = vmatprep.subr.mxu0 0.0
        %428 = vmatpush1.msra.mxu0 %v352
        %429 = vmatprep.subr.mxu0 0.0
        %430 = vmatpush1.msra.mxu0 %v351
        %431 = vmatprep.subr.mxu0 0.0
        %432 = vmatpush1.msra.mxu0 %v350
        %433 = vmatprep.subr.mxu0 0.0
        %434 = vmatpush1.msra.mxu0 %v349
        %435 = vmatprep.subr.mxu0 0.0
        %436 = vmatpush1.msra.mxu0 %v348
        %437 = vmatprep.subr.mxu0 0.0
        %438 = vmatpush2.msra.mxu0 0.0
        %439 = vmatprep.subr.mxu0 0.0
        %440 = vmatpush2.msra.mxu0 0.0
        %441 = vmatprep.subr.mxu0 0.0
        %442 = vmatpush2.msra.mxu0 0.0
        %443 = vmatprep.subr.mxu0 0.0
        %444 = vmatpush2.msra.mxu0 0.0
        %445 = vmatprep.subr.mxu0 0.0
        %446 = vmatpush2.msra.mxu0 0.0
        %447 = vmatprep.subr.mxu0 0.0
        %448 = vmatpush2.msra.mxu0 0.0
        %449 = vmatprep.subr.mxu0 0.0
        %450 = vmatpush2.msra.mxu0 0.0
        %451 = vmatprep.subr.mxu0 0.0
        %452 = vmatpush2.msra.mxu0 0.0
        %453 = vmatprep.subr.mxu0 0.0
        %454 = vmatpush2.msra.mxu0 0.0
        %455 = vmatprep.subr.mxu0 0.0
        %456 = vmatpush2.msra.mxu0 0.0
        %457 = vmatprep.subr.mxu0 0.0
        %458 = vmatpush2.msra.mxu0 0.0
        %459 = vmatprep.subr.mxu0 0.0
        %460 = vmatpush2.msra.mxu0 0.0
        %461 = vmatprep.subr.mxu0 0.0
        %462 = vmatpush2.msra.mxu0 0.0
        %463 = vmatprep.subr.mxu0 0.0
        %464 = vmatpush2.msra.mxu0 0.0
        %465 = vmatprep.subr.mxu0 0.0
        %466 = vmatpush2.msra.mxu0 0.0
        %467 = vmatprep.subr.mxu0 0.0
        %468 = vmatpush2.msra.mxu0 0.0
        %469 = vmatprep.mubr.f32.mxu0 0.0
        %470 = vmatmul.mubr.f32.gmra.mxu0 %v358
        %v471 = vpop.f32.mrf.mxu0
        %v472 = vadd.f32 0.0, %v471
        %v473 = vpop.f32.mrf.mxu0
        %474 = vmatprep.mubr.f32.mxu0 0.0
        %475 = vmatmul.mubr.f32.gmra.mxu0 %v361
        %v476 = vpop.f32.mrf.mxu0
        %v477 = vadd.f32 0.0, %v476
        %v478 = vpop.f32.mrf.mxu0
        %479 = vmatprep.mubr.f32.mxu0 0.0
        %480 = vmatmul.mubr.f32.gmra.mxu0 %v364
        %v481 = vpop.f32.mrf.mxu0
        %v482 = vadd.f32 0.0, %v481
        %v483 = vpop.f32.mrf.mxu0
        %484 = vmatprep.mubr.f32.mxu0 0.0
        %485 = vmatmul.mubr.f32.gmra.mxu0 %v367
        %v486 = vpop.f32.mrf.mxu0
        %v487 = vadd.f32 0.0, %v486
        %v488 = vpop.f32.mrf.mxu0
        %489 = vmatprep.mubr.f32.mxu0 0.0
        %490 = vmatmul.mubr.f32.gmra.mxu0 %v370
        %v491 = vpop.f32.mrf.mxu0
        %v492 = vadd.f32 0.0, %v491
        %v493 = vpop.f32.mrf.mxu0
        %494 = vmatprep.mubr.f32.mxu0 0.0
        %495 = vmatmul.mubr.f32.gmra.mxu0 %v373
        %v496 = vpop.f32.mrf.mxu0
        %v497 = vadd.f32 0.0, %v496
        %v498 = vpop.f32.mrf.mxu0
        %499 = vmatprep.mubr.f32.mxu0 0.0
        %500 = vmatmul.mubr.f32.gmra.mxu0 %v376
        %v501 = vpop.f32.mrf.mxu0
        %v502 = vadd.f32 0.0, %v501
        %v503 = vpop.f32.mrf.mxu0
        %504 = vmatprep.mubr.f32.mxu0 0.0
        %505 = vmatmul.mubr.f32.gmra.mxu0 %v379
        %v506 = vpop.f32.mrf.mxu0
        %v507 = vadd.f32 0.0, %v506
        %v508 = vpop.f32.mrf.mxu0
        %509 = vmatprep.mubr.f32.mxu0 0.0
        %510 = vmatmul.mubr.f32.gmra.mxu0 %v382
        %v511 = vpop.f32.mrf.mxu0
        %v512 = vadd.f32 0.0, %v511
        %v513 = vpop.f32.mrf.mxu0
        %514 = vmatprep.mubr.f32.mxu0 0.0
        %515 = vmatmul.mubr.f32.gmra.mxu0 %v385
        %v516 = vpop.f32.mrf.mxu0
        %v517 = vadd.f32 0.0, %v516
        %v518 = vpop.f32.mrf.mxu0
        %519 = vmatprep.mubr.f32.mxu0 0.0
        %520 = vmatmul.mubr.f32.gmra.mxu0 %v388
        %v521 = vpop.f32.mrf.mxu0
        %v522 = vadd.f32 0.0, %v521
        %v523 = vpop.f32.mrf.mxu0
        %524 = vmatprep.mubr.f32.mxu0 0.0
        %525 = vmatmul.mubr.f32.gmra.mxu0 %v391
        %v526 = vpop.f32.mrf.mxu0
        %v527 = vadd.f32 0.0, %v526
        %v528 = vpop.f32.mrf.mxu0
        %529 = vmatprep.mubr.f32.mxu0 0.0
        %530 = vmatmul.mubr.f32.gmra.mxu0 %v394
        %v531 = vpop.f32.mrf.mxu0
        %v532 = vadd.f32 0.0, %v531
        %v533 = vpop.f32.mrf.mxu0
        %534 = vmatprep.mubr.f32.mxu0 0.0
        %535 = vmatmul.mubr.f32.gmra.mxu0 %v397
        %v536 = vpop.f32.mrf.mxu0
        %v537 = vadd.f32 0.0, %v536
        %v538 = vpop.f32.mrf.mxu0
        %539 = vmatprep.mubr.f32.mxu0 0.0
        %540 = vmatmul.mubr.f32.gmra.mxu0 %v400
        %v541 = vpop.f32.mrf.mxu0
        %v542 = vadd.f32 0.0, %v541
        %v543 = vpop.f32.mrf.mxu0
        %544 = vmatprep.mubr.f32.mxu0 0.0
        %545 = vmatmul.mubr.f32.gmra.mxu0 %v403
        %v546 = vpop.f32.mrf.mxu0
        %v547 = vadd.f32 0.0, %v546
        %v548 = vpop.f32.mrf.mxu0
        %549 = vdwg.mxu0
        %v550 = vlaneseq
        %v551 = vshrl.u32 %v550, 7
        %v552 = vsub.s32 0, %v551
        %v553 = vrot.slane %v331, %v552
        %v554 = vsub.f32 %v472, %v553
        %v555 = vsub.f32 %v477, %v553
        %v556 = vsub.f32 %v482, %v553
        %v557 = vsub.f32 %v487, %v553
        %v558 = vsub.f32 %v492, %v553
        %v559 = vsub.f32 %v497, %v553
        %v560 = vsub.f32 %v502, %v553
        %v561 = vsub.f32 %v507, %v553
        %v562 = vsub.f32 %v512, %v553
        %v563 = vsub.f32 %v517, %v553
        %v564 = vsub.f32 %v522, %v553
        %v565 = vsub.f32 %v527, %v553
        %v566 = vsub.f32 %v532, %v553
        %v567 = vsub.f32 %v537, %v553
        %v568 = vsub.f32 %v542, %v553
        %v569 = vsub.f32 %v547, %v553
        %v570 = vlaneseq
        %v571 = vshrl.u32 %v570, 7
        %v572 = vsub.s32 1, %v571
        %v573 = vrot.slane %v331, %v572
        %v574 = vmul.f32 %v554, %v573
        %v575 = vmul.f32 %v555, %v573
        %v576 = vmul.f32 %v556, %v573
        %v577 = vmul.f32 %v557, %v573
        %v578 = vmul.f32 %v558, %v573
        %v579 = vmul.f32 %v559, %v573
        %v580 = vmul.f32 %v560, %v573
        %v581 = vmul.f32 %v561, %v573
        %v582 = vmul.f32 %v562, %v573
        %v583 = vmul.f32 %v563, %v573
        %v584 = vmul.f32 %v564, %v573
        %v585 = vmul.f32 %v565, %v573
        %v586 = vmul.f32 %v566, %v573
        %v587 = vmul.f32 %v567, %v573
        %v588 = vmul.f32 %v568, %v573
        %v589 = vmul.f32 %v569, %v573
        %vm590 = vcmp.ge.f32.partialorder %v574, 0.0
        %vm591 = vcmp.ge.f32.partialorder %v575, 0.0
        %vm592 = vcmp.ge.f32.partialorder %v576, 0.0
        %vm593 = vcmp.ge.f32.partialorder %v577, 0.0
        %vm594 = vcmp.ge.f32.partialorder %v578, 0.0
        %vm595 = vcmp.ge.f32.partialorder %v579, 0.0
        %vm596 = vcmp.ge.f32.partialorder %v580, 0.0
        %vm597 = vcmp.ge.f32.partialorder %v581, 0.0
        %vm598 = vcmp.ge.f32.partialorder %v582, 0.0
        %vm599 = vcmp.ge.f32.partialorder %v583, 0.0
        %vm600 = vcmp.ge.f32.partialorder %v584, 0.0
        %vm601 = vcmp.ge.f32.partialorder %v585, 0.0
        %vm602 = vcmp.ge.f32.partialorder %v586, 0.0
        %vm603 = vcmp.ge.f32.partialorder %v587, 0.0
        %vm604 = vcmp.ge.f32.partialorder %v588, 0.0
        %vm605 = vcmp.ge.f32.partialorder %v589, 0.0
        %v606 = vmul.f32 %v574, 0.2
        %v607 = vmul.f32 %v575, 0.2
        %v608 = vmul.f32 %v576, 0.2
        %v609 = vmul.f32 %v577, 0.2
        %v610 = vmul.f32 %v578, 0.2
        %v611 = vmul.f32 %v579, 0.2
        %v612 = vmul.f32 %v580, 0.2
        %v613 = vmul.f32 %v581, 0.2
        %v614 = vmul.f32 %v582, 0.2
        %v615 = vmul.f32 %v583, 0.2
        %v616 = vmul.f32 %v584, 0.2
        %v617 = vmul.f32 %v585, 0.2
        %v618 = vmul.f32 %v586, 0.2
        %v619 = vmul.f32 %v587, 0.2
        %v620 = vmul.f32 %v588, 0.2
        %v621 = vmul.f32 %v589, 0.2
        %v622 = vsel %vm590, %v574, %v606
        %v623 = vsel %vm591, %v575, %v607
        %v624 = vsel %vm592, %v576, %v608
        %v625 = vsel %vm593, %v577, %v609
        %v626 = vsel %vm594, %v578, %v610
        %v627 = vsel %vm595, %v579, %v611
        %v628 = vsel %vm596, %v580, %v612
        %v629 = vsel %vm597, %v581, %v613
        %v630 = vsel %vm598, %v582, %v614
        %v631 = vsel %vm599, %v583, %v615
        %v632 = vsel %vm600, %v584, %v616
        %v633 = vsel %vm601, %v585, %v617
        %v634 = vsel %vm602, %v586, %v618
        %v635 = vsel %vm603, %v587, %v619
        %v636 = vsel %vm604, %v588, %v620
        %v637 = vsel %vm605, %v589, %v621
        %v638 = vld [vmem:[%s271] sm:$0xff]
        %v639 = vld [vmem:[%s271 + $0x8] sm:$0xff]
        %v640 = vld [vmem:[%s271 + $0x10] sm:$0xff]
        %v641 = vld [vmem:[%s271 + $0x18] sm:$0xff]
        %v642 = vld [vmem:[%s271 + $0x20] sm:$0xff]
        %v643 = vld [vmem:[%s271 + $0x28] sm:$0xff]
        %v644 = vld [vmem:[%s271 + $0x30] sm:$0xff]
        %v645 = vld [vmem:[%s271 + $0x38] sm:$0xff]
        %v646 = vld [vmem:[%s271 + $0x40] sm:$0xff]
        %v647 = vld [vmem:[%s271 + $0x48] sm:$0xff]
        %v648 = vld [vmem:[%s271 + $0x50] sm:$0xff]
        %v649 = vld [vmem:[%s271 + $0x58] sm:$0xff]
        %v650 = vld [vmem:[%s271 + $0x60] sm:$0xff]
        %v651 = vld [vmem:[%s271 + $0x68] sm:$0xff]
        %v652 = vld [vmem:[%s271 + $0x70] sm:$0xff]
        %v653 = vld [vmem:[%s271 + $0x78] sm:$0xff]
        %v654 = vld [vmem:[#allocation5] sm:$0xff]
        %v655 = vld [vmem:[#allocation5 + $0x8] sm:$0xff]
        %v656 = vld [vmem:[#allocation5 + $0x10] sm:$0xff]
        %v657 = vld [vmem:[#allocation5 + $0x18] sm:$0xff]
        %v658 = vld [vmem:[#allocation5 + $0x20] sm:$0xff]
        %v659 = vld [vmem:[#allocation5 + $0x28] sm:$0xff]
        %v660 = vld [vmem:[#allocation5 + $0x30] sm:$0xff]
        %v661 = vld [vmem:[#allocation5 + $0x38] sm:$0xff]
        %v663 = vsel %vm356, %v638, 0
        %v666 = vsel %vm356, %v639, 0
        %v669 = vsel %vm356, %v640, 0
        %v672 = vsel %vm356, %v641, 0
        %v675 = vsel %vm356, %v642, 0
        %v678 = vsel %vm356, %v643, 0
        %v681 = vsel %vm356, %v644, 0
        %v684 = vsel %vm356, %v645, 0
        %v687 = vsel %vm356, %v646, 0
        %v690 = vsel %vm356, %v647, 0
        %v693 = vsel %vm356, %v648, 0
        %v696 = vsel %vm356, %v649, 0
        %v699 = vsel %vm356, %v650, 0
        %v702 = vsel %vm356, %v651, 0
        %v705 = vsel %vm356, %v652, 0
        %v708 = vsel %vm356, %v653, 0
        %710 = vmatprep.subr.mxu0 0.0
        %711 = vmatpush1.msra.mxu0 0.0
        %712 = vmatprep.subr.mxu0 0.0
        %713 = vmatpush1.msra.mxu0 0.0
        %714 = vmatprep.subr.mxu0 0.0
        %715 = vmatpush1.msra.mxu0 0.0
        %716 = vmatprep.subr.mxu0 0.0
        %717 = vmatpush1.msra.mxu0 0.0
        %718 = vmatprep.subr.mxu0 0.0
        %719 = vmatpush1.msra.mxu0 0.0
        %720 = vmatprep.subr.mxu0 0.0
        %721 = vmatpush1.msra.mxu0 0.0
        %722 = vmatprep.subr.mxu0 0.0
        %723 = vmatpush1.msra.mxu0 0.0
        %724 = vmatprep.subr.mxu0 0.0
        %725 = vmatpush1.msra.mxu0 0.0
        %726 = vmatprep.subr.mxu0 0.0
        %727 = vmatpush1.msra.mxu0 %v661
        %728 = vmatprep.subr.mxu0 0.0
        %729 = vmatpush1.msra.mxu0 %v660
        %730 = vmatprep.subr.mxu0 0.0
        %731 = vmatpush1.msra.mxu0 %v659
        %732 = vmatprep.subr.mxu0 0.0
        %733 = vmatpush1.msra.mxu0 %v658
        %734 = vmatprep.subr.mxu0 0.0
        %735 = vmatpush1.msra.mxu0 %v657
        %736 = vmatprep.subr.mxu0 0.0
        %737 = vmatpush1.msra.mxu0 %v656
        %738 = vmatprep.subr.mxu0 0.0
        %739 = vmatpush1.msra.mxu0 %v655
        %740 = vmatprep.subr.mxu0 0.0
        %741 = vmatpush1.msra.mxu0 %v654
        %742 = vmatprep.subr.mxu0 0.0
        %743 = vmatpush2.msra.mxu0 0.0
        %744 = vmatprep.subr.mxu0 0.0
        %745 = vmatpush2.msra.mxu0 0.0
        %746 = vmatprep.subr.mxu0 0.0
        %747 = vmatpush2.msra.mxu0 0.0
        %748 = vmatprep.subr.mxu0 0.0
        %749 = vmatpush2.msra.mxu0 0.0
        %750 = vmatprep.subr.mxu0 0.0
        %751 = vmatpush2.msra.mxu0 0.0
        %752 = vmatprep.subr.mxu0 0.0
        %753 = vmatpush2.msra.mxu0 0.0
        %754 = vmatprep.subr.mxu0 0.0
        %755 = vmatpush2.msra.mxu0 0.0
        %756 = vmatprep.subr.mxu0 0.0
        %757 = vmatpush2.msra.mxu0 0.0
        %758 = vmatprep.subr.mxu0 0.0
        %759 = vmatpush2.msra.mxu0 0.0
        %760 = vmatprep.subr.mxu0 0.0
        %761 = vmatpush2.msra.mxu0 0.0
        %762 = vmatprep.subr.mxu0 0.0
        %763 = vmatpush2.msra.mxu0 0.0
        %764 = vmatprep.subr.mxu0 0.0
        %765 = vmatpush2.msra.mxu0 0.0
        %766 = vmatprep.subr.mxu0 0.0
        %767 = vmatpush2.msra.mxu0 0.0
        %768 = vmatprep.subr.mxu0 0.0
        %769 = vmatpush2.msra.mxu0 0.0
        %770 = vmatprep.subr.mxu0 0.0
        %771 = vmatpush2.msra.mxu0 0.0
        %772 = vmatprep.subr.mxu0 0.0
        %773 = vmatpush2.msra.mxu0 0.0
        %774 = vmatprep.mubr.f32.mxu0 0.0
        %775 = vmatmul.mubr.f32.gmra.mxu0 %v663
        %v776 = vpop.f32.mrf.mxu0
        %v777 = vadd.f32 0.0, %v776
        %v778 = vpop.f32.mrf.mxu0
        %779 = vmatprep.mubr.f32.mxu0 0.0
        %780 = vmatmul.mubr.f32.gmra.mxu0 %v666
        %v781 = vpop.f32.mrf.mxu0
        %v782 = vadd.f32 0.0, %v781
        %v783 = vpop.f32.mrf.mxu0
        %784 = vmatprep.mubr.f32.mxu0 0.0
        %785 = vmatmul.mubr.f32.gmra.mxu0 %v669
        %v786 = vpop.f32.mrf.mxu0
        %v787 = vadd.f32 0.0, %v786
        %v788 = vpop.f32.mrf.mxu0
        %789 = vmatprep.mubr.f32.mxu0 0.0
        %790 = vmatmul.mubr.f32.gmra.mxu0 %v672
        %v791 = vpop.f32.mrf.mxu0
        %v792 = vadd.f32 0.0, %v791
        %v793 = vpop.f32.mrf.mxu0
        %794 = vmatprep.mubr.f32.mxu0 0.0
        %795 = vmatmul.mubr.f32.gmra.mxu0 %v675
        %v796 = vpop.f32.mrf.mxu0
        %v797 = vadd.f32 0.0, %v796
        %v798 = vpop.f32.mrf.mxu0
        %799 = vmatprep.mubr.f32.mxu0 0.0
        %800 = vmatmul.mubr.f32.gmra.mxu0 %v678
        %v801 = vpop.f32.mrf.mxu0
        %v802 = vadd.f32 0.0, %v801
        %v803 = vpop.f32.mrf.mxu0
        %804 = vmatprep.mubr.f32.mxu0 0.0
        %805 = vmatmul.mubr.f32.gmra.mxu0 %v681
        %v806 = vpop.f32.mrf.mxu0
        %v807 = vadd.f32 0.0, %v806
        %v808 = vpop.f32.mrf.mxu0
        %809 = vmatprep.mubr.f32.mxu0 0.0
        %810 = vmatmul.mubr.f32.gmra.mxu0 %v684
        %v811 = vpop.f32.mrf.mxu0
        %v812 = vadd.f32 0.0, %v811
        %v813 = vpop.f32.mrf.mxu0
        %814 = vmatprep.mubr.f32.mxu0 0.0
        %815 = vmatmul.mubr.f32.gmra.mxu0 %v687
        %v816 = vpop.f32.mrf.mxu0
        %v817 = vadd.f32 0.0, %v816
        %v818 = vpop.f32.mrf.mxu0
        %819 = vmatprep.mubr.f32.mxu0 0.0
        %820 = vmatmul.mubr.f32.gmra.mxu0 %v690
        %v821 = vpop.f32.mrf.mxu0
        %v822 = vadd.f32 0.0, %v821
        %v823 = vpop.f32.mrf.mxu0
        %824 = vmatprep.mubr.f32.mxu0 0.0
        %825 = vmatmul.mubr.f32.gmra.mxu0 %v693
        %v826 = vpop.f32.mrf.mxu0
        %v827 = vadd.f32 0.0, %v826
        %v828 = vpop.f32.mrf.mxu0
        %829 = vmatprep.mubr.f32.mxu0 0.0
        %830 = vmatmul.mubr.f32.gmra.mxu0 %v696
        %v831 = vpop.f32.mrf.mxu0
        %v832 = vadd.f32 0.0, %v831
        %v833 = vpop.f32.mrf.mxu0
        %834 = vmatprep.mubr.f32.mxu0 0.0
        %835 = vmatmul.mubr.f32.gmra.mxu0 %v699
        %v836 = vpop.f32.mrf.mxu0
        %v837 = vadd.f32 0.0, %v836
        %v838 = vpop.f32.mrf.mxu0
        %839 = vmatprep.mubr.f32.mxu0 0.0
        %840 = vmatmul.mubr.f32.gmra.mxu0 %v702
        %v841 = vpop.f32.mrf.mxu0
        %v842 = vadd.f32 0.0, %v841
        %v843 = vpop.f32.mrf.mxu0
        %844 = vmatprep.mubr.f32.mxu0 0.0
        %845 = vmatmul.mubr.f32.gmra.mxu0 %v705
        %v846 = vpop.f32.mrf.mxu0
        %v847 = vadd.f32 0.0, %v846
        %v848 = vpop.f32.mrf.mxu0
        %849 = vmatprep.mubr.f32.mxu0 0.0
        %850 = vmatmul.mubr.f32.gmra.mxu0 %v708
        %v851 = vpop.f32.mrf.mxu0
        %v852 = vadd.f32 0.0, %v851
        %v853 = vpop.f32.mrf.mxu0
        %854 = vdwg.mxu0
        %vm855 = vcmp.ge.f32.partialorder %v777, 0.0
        %vm856 = vcmp.ge.f32.partialorder %v782, 0.0
        %vm857 = vcmp.ge.f32.partialorder %v787, 0.0
        %vm858 = vcmp.ge.f32.partialorder %v792, 0.0
        %vm859 = vcmp.ge.f32.partialorder %v797, 0.0
        %vm860 = vcmp.ge.f32.partialorder %v802, 0.0
        %vm861 = vcmp.ge.f32.partialorder %v807, 0.0
        %vm862 = vcmp.ge.f32.partialorder %v812, 0.0
        %vm863 = vcmp.ge.f32.partialorder %v817, 0.0
        %vm864 = vcmp.ge.f32.partialorder %v822, 0.0
        %vm865 = vcmp.ge.f32.partialorder %v827, 0.0
        %vm866 = vcmp.ge.f32.partialorder %v832, 0.0
        %vm867 = vcmp.ge.f32.partialorder %v837, 0.0
        %vm868 = vcmp.ge.f32.partialorder %v842, 0.0
        %vm869 = vcmp.ge.f32.partialorder %v847, 0.0
        %vm870 = vcmp.ge.f32.partialorder %v852, 0.0
        %v871 = vmul.f32 %v777, 0.2
        %v872 = vmul.f32 %v782, 0.2
        %v873 = vmul.f32 %v787, 0.2
        %v874 = vmul.f32 %v792, 0.2
        %v875 = vmul.f32 %v797, 0.2
        %v876 = vmul.f32 %v802, 0.2
        %v877 = vmul.f32 %v807, 0.2
        %v878 = vmul.f32 %v812, 0.2
        %v879 = vmul.f32 %v817, 0.2
        %v880 = vmul.f32 %v822, 0.2
        %v881 = vmul.f32 %v827, 0.2
        %v882 = vmul.f32 %v832, 0.2
        %v883 = vmul.f32 %v837, 0.2
        %v884 = vmul.f32 %v842, 0.2
        %v885 = vmul.f32 %v847, 0.2
        %v886 = vmul.f32 %v852, 0.2
        %v887 = vsel %vm855, %v777, %v871
        %v888 = vsel %vm856, %v782, %v872
        %v889 = vsel %vm857, %v787, %v873
        %v890 = vsel %vm858, %v792, %v874
        %v891 = vsel %vm859, %v797, %v875
        %v892 = vsel %vm860, %v802, %v876
        %v893 = vsel %vm861, %v807, %v877
        %v894 = vsel %vm862, %v812, %v878
        %v895 = vsel %vm863, %v817, %v879
        %v896 = vsel %vm864, %v822, %v880
        %v897 = vsel %vm865, %v827, %v881
        %v898 = vsel %vm866, %v832, %v882
        %v899 = vsel %vm867, %v837, %v883
        %v900 = vsel %vm868, %v842, %v884
        %v901 = vsel %vm869, %v847, %v885
        %v902 = vsel %vm870, %v852, %v886
        %919 = vrot.lane.b32.xlu0 %v887, 64
        %v920 = vpop.permute.xlu0 %919
        %921 = vrot.lane.b32.xlu0 %v888, 64
        %v922 = vpop.permute.xlu0 %921
        %923 = vrot.lane.b32.xlu0 %v889, 64
        %v924 = vpop.permute.xlu0 %923
        %925 = vrot.lane.b32.xlu0 %v890, 64
        %v926 = vpop.permute.xlu0 %925
        %927 = vrot.lane.b32.xlu0 %v891, 64
        %v928 = vpop.permute.xlu0 %927
        %929 = vrot.lane.b32.xlu0 %v892, 64
        %v930 = vpop.permute.xlu0 %929
        %931 = vrot.lane.b32.xlu0 %v893, 64
        %v932 = vpop.permute.xlu0 %931
        %933 = vrot.lane.b32.xlu0 %v894, 64
        %v934 = vpop.permute.xlu0 %933
        %935 = vrot.lane.b32.xlu0 %v895, 64
        %v936 = vpop.permute.xlu0 %935
        %937 = vrot.lane.b32.xlu0 %v896, 64
        %v938 = vpop.permute.xlu0 %937
        %939 = vrot.lane.b32.xlu0 %v897, 64
        %v940 = vpop.permute.xlu0 %939
        %941 = vrot.lane.b32.xlu0 %v898, 64
        %v942 = vpop.permute.xlu0 %941
        %943 = vrot.lane.b32.xlu0 %v899, 64
        %v944 = vpop.permute.xlu0 %943
        %945 = vrot.lane.b32.xlu0 %v900, 64
        %v946 = vpop.permute.xlu0 %945
        %947 = vrot.lane.b32.xlu0 %v901, 64
        %v948 = vpop.permute.xlu0 %947
        %949 = vrot.lane.b32.xlu0 %v902, 64
        %v950 = vpop.permute.xlu0 %949
        %v967 = vsel %vm356, %v622, %v920
        %v968 = vsel %vm356, %v623, %v922
        %v969 = vsel %vm356, %v624, %v924
        %v970 = vsel %vm356, %v625, %v926
        %v971 = vsel %vm356, %v626, %v928
        %v972 = vsel %vm356, %v627, %v930
        %v973 = vsel %vm356, %v628, %v932
        %v974 = vsel %vm356, %v629, %v934
        %v975 = vsel %vm356, %v630, %v936
        %v976 = vsel %vm356, %v631, %v938
        %v977 = vsel %vm356, %v632, %v940
        %v978 = vsel %vm356, %v633, %v942
        %v979 = vsel %vm356, %v634, %v944
        %v980 = vsel %vm356, %v635, %v946
        %v981 = vsel %vm356, %v636, %v948
        %v982 = vsel %vm356, %v637, %v950
        %983 = vst [vmem:[%s314] sm:$0xff] %v967
        %984 = vst [vmem:[%s314 + $0x8] sm:$0xff] %v968
        %985 = vst [vmem:[%s314 + $0x10] sm:$0xff] %v969
        %986 = vst [vmem:[%s314 + $0x18] sm:$0xff] %v970
        %987 = vst [vmem:[%s314 + $0x20] sm:$0xff] %v971
        %988 = vst [vmem:[%s314 + $0x28] sm:$0xff] %v972
        %989 = vst [vmem:[%s314 + $0x30] sm:$0xff] %v973
        %990 = vst [vmem:[%s314 + $0x38] sm:$0xff] %v974
        %991 = vst [vmem:[%s314 + $0x40] sm:$0xff] %v975
        %992 = vst [vmem:[%s314 + $0x48] sm:$0xff] %v976
        %993 = vst [vmem:[%s314 + $0x50] sm:$0xff] %v977
        %994 = vst [vmem:[%s314 + $0x58] sm:$0xff] %v978
        %995 = vst [vmem:[%s314 + $0x60] sm:$0xff] %v979
        %996 = vst [vmem:[%s314 + $0x68] sm:$0xff] %v980
        %997 = vst [vmem:[%s314 + $0x70] sm:$0xff] %v981
        %998 = vst [vmem:[%s314 + $0x78] sm:$0xff] %v982
        %s999 = sand.u32 %s169, 1
        %s1000 = scalar_lea.sflag [#allocation4], %s999
        %s1001 = sand.u32 %s169, 1
        %s1002 = smul.addr %s1001, 128
        %s1003 = scalar_lea.vmem [#allocation7], %s1002
        // Predicated region
        $region49: #{unetcat_forward.3} parent=39 // pred_check
          %p1004 = pneg %p179
        $region50: #{unetcat_forward.3} parent=39 // pred_check_branch
          %1006 = sbr.rel (%p1004) target = $region52
        $region51: #{unetcat_forward.3} parent=39 // pred_region
          %s1007 = smul.u32 16, %s28
          %s1009 = ssub.s32 2048, 2048
          %1010 = vsyncadd %s1000, %s1009
          %s1011 = smul.addr %s27, 32
          %s1012 = sadd.s32 %s1007, %s1011
          %s1013 = smul.addr %s1012, 128
          %s1014 = scalar_lea.hbm %s5, %s1013
          %s1015 = sshll.u32 %s1003, 4
          %s1016 = int_to_ptr.vmem [resolvable:$true] %s1015
          %1021 = dma.vmem_to_hbm [thread:$0]  %s1016, 2048, %s1014, %s1000, 128, 128, 8
        $region52: #{unetcat_forward.3} parent=39 // pred_fallthru
          _
      $region40: #{unetcat_forward.3} parent=5 // pred_fallthru
        _
      %p1022 = scmp.le.s32.totalorder 2, %s18
      // Predicated region
      $region53: #{unetcat_forward.3} parent=5 // pred_check
        %p1023 = pneg %p1022
      $region54: #{unetcat_forward.3} parent=5 // pred_check_branch
        %1025 = sbr.rel (%p1023) target = $region56
      $region55: #{unetcat_forward.3} parent=5 // pred_region
        %s1026 = ssub.s32 %s18, 2
        // Predicated region
        $region57: #{unetcat_forward.3} parent=55 // pred_check
          %p1027 = pneg %p185
        $region58: #{unetcat_forward.3} parent=55 // pred_check_branch
          %1029 = sbr.rel (%p1027) target = $region60
        $region59: #{unetcat_forward.3} parent=55 // pred_region
          %s1030 = sand.u32 %s170, 1
          %s1031 = scalar_lea.sflag [#allocation4], %s1030
          %s1032 = sand.u32 %s170, 1
          %s1033 = smul.addr %s1032, 128
          %s1034 = scalar_lea.vmem [#allocation7], %s1033
          %1035 = dma.done %s1031, 2048
        $region60: #{unetcat_forward.3} parent=55 // pred_fallthru
          _
      $region56: #{unetcat_forward.3} parent=5 // pred_fallthru
        _
    $region6: #{unetcat_forward.3} parent=1 // loop_footer
      %s22 = sadd.s32 1, %s18
    $region7: #{unetcat_forward.3} parent=1 // loop_footer_branch
      %17 = sbr.rel target = $region3
    $region8: #{unetcat_forward.3} parent=1 // loop_exit
      _
    %1036 = vsyncpa [#allocation3], 1
    %s1037 = scalar_lea.sflag [#allocation3], 1
    %1038 = vsyncpa %s1037, 1
    %1039 = vsyncpa [#allocation6], 1
    %1040 = vsyncpa [#allocation4], 1
    %s1041 = scalar_lea.sflag [#allocation4], 1
    %1042 = vsyncpa %s1041, 1

</llo_original>
